<compile_context>
chip_gen: v5e
topology: v5e:2x2
jax: 0.10.0
libtpu: 0.0.40
codegen_flags: <defaults>
</compile_context>

<pallas_src>
import functools

import jax
import jax.numpy as jnp
import numpy as np
from jax.experimental import pallas as pl
from jax.experimental.pallas import tpu as pltpu


def _dfusion_kernel(rl_ref, off_ref, w_ref, bias_ref, x_ref, o_ref, *,
                    max_cav, C, H, W):
    """Accumulate one agent's 3x3x3-conv contribution into the output block.

    rl_ref, off_ref : SMEM (B,) int32 scalar-prefetch (record_len, offsets)
    w_ref           : SMEM (max_cav*27,) f32 conv weights [cav, dc, dh, dw]
    bias_ref        : SMEM (1,) f32 bias
    x_ref           : VMEM (1, C+2, H+2, W+2) one agent's halo-padded features
    o_ref           : VMEM (1, C, H, W) resident accumulator / output
    """
    b = pl.program_id(0)
    cav = pl.program_id(1)

    # First agent slot of this group: zero the resident output block.
    @pl.when(cav == 0)
    def _init():
        o_ref[0] = jnp.zeros((C, H, W), jnp.float32)

    # Skip agent slots this group does not have (the group's zero padding).
    @pl.when(cav < rl_ref[b])
    def _accumulate():
        xp = x_ref[0].astype(jnp.float32)          # (C+2, H+2, W+2)
        wbase = cav * 27                           # dynamic SMEM weight base
        acc = jnp.zeros((C, H, W), jnp.float32)
        # Hoisted shift: one sublane/lane shifted view per (dh, dw); the dc
        # shift is a leading-dim slice (address offset only, no relayout).
        for dh in range(3):
            for dw in range(3):
                xs = xp[:, dh:dh + H, dw:dw + W]   # (C+2, H, W)
                for dc in range(3):
                    w = w_ref[wbase + dc * 9 + dh * 3 + dw]
                    acc = acc + w * xs[dc:dc + C]
        o_ref[0] = o_ref[0] + acc

    # Last agent slot: add bias, ReLU, in place (output stays lane-dense).
    @pl.when(cav == max_cav - 1)
    def _finalize():
        o_ref[0] = jnp.maximum(o_ref[0] + bias_ref[0], 0.0)


@functools.partial(jax.jit, static_argnums=(4,))
def dfusion_forward(x, record_len, weight, bias, max_cav):
    """x: (N, C, H, W) f32; record_len: int array (B,) with sum == N and each
    entry in [1, max_cav]; weight: (1, max_cav, 3, 3, 3); bias: (1,)."""
    N, C, H, W = x.shape
    record_len = jnp.asarray(record_len, jnp.int32)
    B = record_len.shape[0]
    offsets = jnp.concatenate(
        [jnp.zeros((1,), jnp.int32),
         jnp.cumsum(record_len, dtype=jnp.int32)[:-1]])

    # Single +1 halo pad of the raw input so the kernel is a pure "valid"
    # 3x3x3 conv. No regroup / stack / pad-to-max_cav copies hit HBM.
    xh = jnp.pad(x.astype(jnp.float32), ((0, 0), (1, 1), (1, 1), (1, 1)))

    w_flat = weight.reshape(-1).astype(jnp.float32)   # (max_cav*27,)
    b_flat = bias.reshape(-1).astype(jnp.float32)     # (1,)

    kernel = functools.partial(
        _dfusion_kernel, max_cav=max_cav, C=C, H=H, W=W)

    def x_index_map(b, cav, rl_ref, off_ref):
        # Fused regroup: HBM row of (group b, agent slot cav). Invalid slots
        # are clamped to a valid row (their compute is skipped via pl.when).
        return (off_ref[b] + jnp.minimum(cav, rl_ref[b] - 1), 0, 0, 0)

    def o_index_map(b, cav, rl_ref, off_ref):
        return (b, 0, 0, 0)

    grid_spec = pltpu.PrefetchScalarGridSpec(
        num_scalar_prefetch=2,
        grid=(B, max_cav),
        in_specs=[
            pl.BlockSpec(memory_space=pltpu.MemorySpace.SMEM),   # weights
            pl.BlockSpec(memory_space=pltpu.MemorySpace.SMEM),   # bias
            pl.BlockSpec((1, C + 2, H + 2, W + 2), x_index_map),
        ],
        out_specs=pl.BlockSpec((1, C, H, W), o_index_map),
    )

    return pl.pallas_call(
        kernel,
        out_shape=jax.ShapeDtypeStruct((B, C, H, W), jnp.float32),
        grid_spec=grid_spec,
        compiler_params=pltpu.CompilerParams(
            dimension_semantics=("parallel", "arbitrary"),
            vmem_limit_bytes=32 * 1024 * 1024),
    )(record_len, offsets, w_flat, b_flat, xh)


def _reference(x, record_len, weight, bias, max_cav):
    """Pure-JAX reference (matches the PyTorch forward)."""
    record_len = [int(r) for r in record_len]
    N, C, H, W = x.shape
    groups = []
    off = 0
    for rl in record_len:
        xx = x[off:off + rl]
        off += rl
        if rl < max_cav:
            xx = jnp.concatenate(
                [xx, jnp.zeros((max_cav - rl, C, H, W), x.dtype)], axis=0)
        groups.append(xx)
    xb = jnp.stack(groups, axis=0)  # (B, max_cav, C, H, W)
    y = jax.lax.conv_general_dilated(
        xb, weight, window_strides=(1, 1, 1),
        padding=((1, 1), (1, 1), (1, 1)),
        dimension_numbers=("NCDHW", "OIDHW", "NCDHW"))
    y = y + bias.reshape(1, 1, 1, 1, 1)
    return jnp.maximum(y, 0.0)[:, 0]


if __name__ == "__main__":
    max_cav = 2
    C, H, W = 4, 16, 16
    record_len_list = [2, 1]     # B = 2 groups, N = 3 total agent features
    N = sum(record_len_list)

    key = jax.random.PRNGKey(0)
    kx, kw, kb = jax.random.split(key, 3)

    x = jax.random.normal(kx, (N, C, H, W), dtype=jnp.float32)

    # Deterministic Conv3d init (PyTorch-default style: U(-1/sqrt(fan_in), ..))
    fan_in = max_cav * 3 * 3 * 3
    bound = 1.0 / np.sqrt(fan_in)
    weight = jax.random.uniform(
        kw, (1, max_cav, 3, 3, 3), minval=-bound, maxval=bound,
        dtype=jnp.float32)
    bias = jax.random.uniform(
        kb, (1,), minval=-bound, maxval=bound, dtype=jnp.float32)

    record_len = jnp.asarray(record_len_list, dtype=jnp.int32)  # traced path
    out = dfusion_forward(x, record_len, weight, bias, max_cav)
    out = jax.block_until_ready(out)

    ref = jax.block_until_ready(
        _reference(x, record_len_list, weight, bias, max_cav))
    assert out.shape == (len(record_len_list), C, H, W)
    np.testing.assert_allclose(np.asarray(out), np.asarray(ref),
                               rtol=1e-4, atol=1e-4)
    print("KERNEL_OK")
</pallas_src>

<mosaic_0001>
module attributes {stable_mosaic.version = 11 : i64} {
  func.func @_dfusion_kernel(%arg0: i32, %arg1: i32, %arg2: memref<2xi32, #tpu.memory_space<smem>>, %arg3: memref<2xi32, #tpu.memory_space<smem>>, %arg4: memref<54xf32, #tpu.memory_space<smem>>, %arg5: memref<1xf32, #tpu.memory_space<smem>>, %arg6: memref<1x6x18x18xf32, #tpu.memory_space<vmem>>, %arg7: memref<1x4x16x16xf32, #tpu.memory_space<vmem>>) attributes {dimension_semantics = [#tpu.dimension_semantics<parallel>, #tpu.dimension_semantics<arbitrary>], iteration_bounds = array<i64: 2, 2>, scalar_prefetch = 2 : i64, scratch_operands = 0 : i64, tpu.core_type = #tpu.core_type<tc>, window_params = [{transform_indices = @transform_0, window_bounds = array<i64: 54>}, {transform_indices = @transform_1, window_bounds = array<i64: 1>}, {transform_indices = @transform_2, window_bounds = array<i64: 1, 6, 18, 18>}, {transform_indices = @transform_3, window_bounds = array<i64: 1, 4, 16, 16>}]} {
    %c0_i32 = arith.constant 0 : i32
    %0 = arith.cmpi eq, %arg1, %c0_i32 : i32
    %1 = arith.extui %0 : i1 to i32
    %c0_i32_0 = arith.constant 0 : i32
    %2 = arith.cmpi ne, %1, %c0_i32_0 : i32
    scf.if %2 {
      %cst = arith.constant 0.000000e+00 : f32
      %11 = vector.broadcast %cst : f32 to vector<4x16x16xf32>
      %c0 = arith.constant 0 : index
      %c0_3 = arith.constant 0 : index
      %c0_4 = arith.constant 0 : index
      %c0_5 = arith.constant 0 : index
      %12 = vector.load %arg7[%c0, %c0_3, %c0_4, %c0_5] : memref<1x4x16x16xf32, #tpu.memory_space<vmem>>, vector<1x4x16x16xf32>
      %13 = vector.shape_cast %12 : vector<1x4x16x16xf32> to vector<4x16x16xf32>
      %14 = vector.shape_cast %11 : vector<4x16x16xf32> to vector<1x4x16x16xf32>
      tpu.vector_store %arg7[%c0, %c0_3, %c0_4, %c0_5], %14 {strides = array<i32>} : memref<1x4x16x16xf32, #tpu.memory_space<vmem>>, vector<1x4x16x16xf32>,
    } else {
    }
    %3 = arith.index_cast %arg0 : i32 to index
    %4 = memref.load %arg2[%3] : memref<2xi32, #tpu.memory_space<smem>>
    %5 = arith.cmpi slt, %arg1, %4 : i32
    %6 = arith.extui %5 : i1 to i32
    %c0_i32_1 = arith.constant 0 : i32
    %7 = arith.cmpi ne, %6, %c0_i32_1 : i32
    scf.if %7 {
      %c0 = arith.constant 0 : index
      %c0_3 = arith.constant 0 : index
      %c0_4 = arith.constant 0 : index
      %c0_5 = arith.constant 0 : index
      %11 = vector.load %arg6[%c0, %c0_3, %c0_4, %c0_5] : memref<1x6x18x18xf32, #tpu.memory_space<vmem>>, vector<1x6x18x18xf32>
      %12 = vector.shape_cast %11 : vector<1x6x18x18xf32> to vector<6x18x18xf32>
      %c27_i32 = arith.constant 27 : i32
      %13 = arith.muli %arg1, %c27_i32 : i32
      %cst = arith.constant 0.000000e+00 : f32
      %14 = vector.broadcast %cst : f32 to vector<4x16x16xf32>
      %15 = vector.extract_strided_slice %12 {offsets = [0, 0, 0], sizes = [6, 16, 16], strides = [1, 1, 1]} : vector<6x18x18xf32> to vector<6x16x16xf32>
      %c0_i32_6 = arith.constant 0 : i32
      %16 = arith.addi %13, %c0_i32_6 : i32
      %c0_i32_7 = arith.constant 0 : i32
      %17 = arith.addi %16, %c0_i32_7 : i32
      %c0_i32_8 = arith.constant 0 : i32
      %18 = arith.addi %17, %c0_i32_8 : i32
      %19 = arith.index_cast %18 : i32 to index
      %20 = memref.load %arg4[%19] : memref<54xf32, #tpu.memory_space<smem>>
      %21 = vector.extract_strided_slice %15 {offsets = [0, 0, 0], sizes = [4, 16, 16], strides = [1, 1, 1]} : vector<6x16x16xf32> to vector<4x16x16xf32>
      %22 = vector.broadcast %20 : f32 to vector<4x16x16xf32>
      %23 = arith.mulf %22, %21 : vector<4x16x16xf32>
      %24 = arith.addf %14, %23 : vector<4x16x16xf32>
      %c9_i32 = arith.constant 9 : i32
      %25 = arith.addi %13, %c9_i32 : i32
      %c0_i32_9 = arith.constant 0 : i32
      %26 = arith.addi %25, %c0_i32_9 : i32
      %c0_i32_10 = arith.constant 0 : i32
      %27 = arith.addi %26, %c0_i32_10 : i32
      %28 = arith.index_cast %27 : i32 to index
      %29 = memref.load %arg4[%28] : memref<54xf32, #tpu.memory_space<smem>>
      %30 = vector.extract_strided_slice %15 {offsets = [1, 0, 0], sizes = [4, 16, 16], strides = [1, 1, 1]} : vector<6x16x16xf32> to vector<4x16x16xf32>
      %31 = vector.broadcast %29 : f32 to vector<4x16x16xf32>
      %32 = arith.mulf %31, %30 : vector<4x16x16xf32>
      %33 = arith.addf %24, %32 : vector<4x16x16xf32>
      %c18_i32 = arith.constant 18 : i32
      %34 = arith.addi %13, %c18_i32 : i32
      %c0_i32_11 = arith.constant 0 : i32
      %35 = arith.addi %34, %c0_i32_11 : i32
      %c0_i32_12 = arith.constant 0 : i32
      %36 = arith.addi %35, %c0_i32_12 : i32
      %37 = arith.index_cast %36 : i32 to index
      %38 = memref.load %arg4[%37] : memref<54xf32, #tpu.memory_space<smem>>
      %39 = vector.extract_strided_slice %15 {offsets = [2, 0, 0], sizes = [4, 16, 16], strides = [1, 1, 1]} : vector<6x16x16xf32> to vector<4x16x16xf32>
      %40 = vector.broadcast %38 : f32 to vector<4x16x16xf32>
      %41 = arith.mulf %40, %39 : vector<4x16x16xf32>
      %42 = arith.addf %33, %41 : vector<4x16x16xf32>
      %43 = vector.extract_strided_slice %12 {offsets = [0, 0, 1], sizes = [6, 16, 16], strides = [1, 1, 1]} : vector<6x18x18xf32> to vector<6x16x16xf32>
      %c0_i32_13 = arith.constant 0 : i32
      %44 = arith.addi %13, %c0_i32_13 : i32
      %c0_i32_14 = arith.constant 0 : i32
      %45 = arith.addi %44, %c0_i32_14 : i32
      %c1_i32_15 = arith.constant 1 : i32
      %46 = arith.addi %45, %c1_i32_15 : i32
      %47 = arith.index_cast %46 : i32 to index
      %48 = memref.load %arg4[%47] : memref<54xf32, #tpu.memory_space<smem>>
      %49 = vector.extract_strided_slice %43 {offsets = [0, 0, 0], sizes = [4, 16, 16], strides = [1, 1, 1]} : vector<6x16x16xf32> to vector<4x16x16xf32>
      %50 = vector.broadcast %48 : f32 to vector<4x16x16xf32>
      %51 = arith.mulf %50, %49 : vector<4x16x16xf32>
      %52 = arith.addf %42, %51 : vector<4x16x16xf32>
      %c9_i32_16 = arith.constant 9 : i32
      %53 = arith.addi %13, %c9_i32_16 : i32
      %c0_i32_17 = arith.constant 0 : i32
      %54 = arith.addi %53, %c0_i32_17 : i32
      %c1_i32_18 = arith.constant 1 : i32
      %55 = arith.addi %54, %c1_i32_18 : i32
      %56 = arith.index_cast %55 : i32 to index
      %57 = memref.load %arg4[%56] : memref<54xf32, #tpu.memory_space<smem>>
      %58 = vector.extract_strided_slice %43 {offsets = [1, 0, 0], sizes = [4, 16, 16], strides = [1, 1, 1]} : vector<6x16x16xf32> to vector<4x16x16xf32>
      %59 = vector.broadcast %57 : f32 to vector<4x16x16xf32>
      %60 = arith.mulf %59, %58 : vector<4x16x16xf32>
      %61 = arith.addf %52, %60 : vector<4x16x16xf32>
      %c18_i32_19 = arith.constant 18 : i32
      %62 = arith.addi %13, %c18_i32_19 : i32
      %c0_i32_20 = arith.constant 0 : i32
      %63 = arith.addi %62, %c0_i32_20 : i32
      %c1_i32_21 = arith.constant 1 : i32
      %64 = arith.addi %63, %c1_i32_21 : i32
      %65 = arith.index_cast %64 : i32 to index
      %66 = memref.load %arg4[%65] : memref<54xf32, #tpu.memory_space<smem>>
      %67 = vector.extract_strided_slice %43 {offsets = [2, 0, 0], sizes = [4, 16, 16], strides = [1, 1, 1]} : vector<6x16x16xf32> to vector<4x16x16xf32>
      %68 = vector.broadcast %66 : f32 to vector<4x16x16xf32>
      %69 = arith.mulf %68, %67 : vector<4x16x16xf32>
      %70 = arith.addf %61, %69 : vector<4x16x16xf32>
      %71 = vector.extract_strided_slice %12 {offsets = [0, 0, 2], sizes = [6, 16, 16], strides = [1, 1, 1]} : vector<6x18x18xf32> to vector<6x16x16xf32>
      %c0_i32_22 = arith.constant 0 : i32
      %72 = arith.addi %13, %c0_i32_22 : i32
      %c0_i32_23 = arith.constant 0 : i32
      %73 = arith.addi %72, %c0_i32_23 : i32
      %c2_i32 = arith.constant 2 : i32
      %74 = arith.addi %73, %c2_i32 : i32
      %75 = arith.index_cast %74 : i32 to index
      %76 = memref.load %arg4[%75] : memref<54xf32, #tpu.memory_space<smem>>
      %77 = vector.extract_strided_slice %71 {offsets = [0, 0, 0], sizes = [4, 16, 16], strides = [1, 1, 1]} : vector<6x16x16xf32> to vector<4x16x16xf32>
      %78 = vector.broadcast %76 : f32 to vector<4x16x16xf32>
      %79 = arith.mulf %78, %77 : vector<4x16x16xf32>
      %80 = arith.addf %70, %79 : vector<4x16x16xf32>
      %c9_i32_24 = arith.constant 9 : i32
      %81 = arith.addi %13, %c9_i32_24 : i32
      %c0_i32_25 = arith.constant 0 : i32
      %82 = arith.addi %81, %c0_i32_25 : i32
      %c2_i32_26 = arith.constant 2 : i32
      %83 = arith.addi %82, %c2_i32_26 : i32
      %84 = arith.index_cast %83 : i32 to index
      %85 = memref.load %arg4[%84] : memref<54xf32, #tpu.memory_space<smem>>
      %86 = vector.extract_strided_slice %71 {offsets = [1, 0, 0], sizes = [4, 16, 16], strides = [1, 1, 1]} : vector<6x16x16xf32> to vector<4x16x16xf32>
      %87 = vector.broadcast %85 : f32 to vector<4x16x16xf32>
      %88 = arith.mulf %87, %86 : vector<4x16x16xf32>
      %89 = arith.addf %80, %88 : vector<4x16x16xf32>
      %c18_i32_27 = arith.constant 18 : i32
      %90 = arith.addi %13, %c18_i32_27 : i32
      %c0_i32_28 = arith.constant 0 : i32
      %91 = arith.addi %90, %c0_i32_28 : i32
      %c2_i32_29 = arith.constant 2 : i32
      %92 = arith.addi %91, %c2_i32_29 : i32
      %93 = arith.index_cast %92 : i32 to index
      %94 = memref.load %arg4[%93] : memref<54xf32, #tpu.memory_space<smem>>
      %95 = vector.extract_strided_slice %71 {offsets = [2, 0, 0], sizes = [4, 16, 16], strides = [1, 1, 1]} : vector<6x16x16xf32> to vector<4x16x16xf32>
      %96 = vector.broadcast %94 : f32 to vector<4x16x16xf32>
      %97 = arith.mulf %96, %95 : vector<4x16x16xf32>
      %98 = arith.addf %89, %97 : vector<4x16x16xf32>
      %99 = vector.extract_strided_slice %12 {offsets = [0, 1, 0], sizes = [6, 16, 16], strides = [1, 1, 1]} : vector<6x18x18xf32> to vector<6x16x16xf32>
      %c0_i32_30 = arith.constant 0 : i32
      %100 = arith.addi %13, %c0_i32_30 : i32
      %c3_i32 = arith.constant 3 : i32
      %101 = arith.addi %100, %c3_i32 : i32
      %c0_i32_31 = arith.constant 0 : i32
      %102 = arith.addi %101, %c0_i32_31 : i32
      %103 = arith.index_cast %102 : i32 to index
      %104 = memref.load %arg4[%103] : memref<54xf32, #tpu.memory_space<smem>>
      %105 = vector.extract_strided_slice %99 {offsets = [0, 0, 0], sizes = [4, 16, 16], strides = [1, 1, 1]} : vector<6x16x16xf32> to vector<4x16x16xf32>
      %106 = vector.broadcast %104 : f32 to vector<4x16x16xf32>
      %107 = arith.mulf %106, %105 : vector<4x16x16xf32>
      %108 = arith.addf %98, %107 : vector<4x16x16xf32>
      %c9_i32_32 = arith.constant 9 : i32
      %109 = arith.addi %13, %c9_i32_32 : i32
      %c3_i32_33 = arith.constant 3 : i32
      %110 = arith.addi %109, %c3_i32_33 : i32
      %c0_i32_34 = arith.constant 0 : i32
      %111 = arith.addi %110, %c0_i32_34 : i32
      %112 = arith.index_cast %111 : i32 to index
      %113 = memref.load %arg4[%112] : memref<54xf32, #tpu.memory_space<smem>>
      %114 = vector.extract_strided_slice %99 {offsets = [1, 0, 0], sizes = [4, 16, 16], strides = [1, 1, 1]} : vector<6x16x16xf32> to vector<4x16x16xf32>
      %115 = vector.broadcast %113 : f32 to vector<4x16x16xf32>
      %116 = arith.mulf %115, %114 : vector<4x16x16xf32>
      %117 = arith.addf %108, %116 : vector<4x16x16xf32>
      %c18_i32_35 = arith.constant 18 : i32
      %118 = arith.addi %13, %c18_i32_35 : i32
      %c3_i32_36 = arith.constant 3 : i32
      %119 = arith.addi %118, %c3_i32_36 : i32
      %c0_i32_37 = arith.constant 0 : i32
      %120 = arith.addi %119, %c0_i32_37 : i32
      %121 = arith.index_cast %120 : i32 to index
      %122 = memref.load %arg4[%121] : memref<54xf32, #tpu.memory_space<smem>>
      %123 = vector.extract_strided_slice %99 {offsets = [2, 0, 0], sizes = [4, 16, 16], strides = [1, 1, 1]} : vector<6x16x16xf32> to vector<4x16x16xf32>
      %124 = vector.broadcast %122 : f32 to vector<4x16x16xf32>
      %125 = arith.mulf %124, %123 : vector<4x16x16xf32>
      %126 = arith.addf %117, %125 : vector<4x16x16xf32>
      %127 = vector.extract_strided_slice %12 {offsets = [0, 1, 1], sizes = [6, 16, 16], strides = [1, 1, 1]} : vector<6x18x18xf32> to vector<6x16x16xf32>
      %c0_i32_38 = arith.constant 0 : i32
      %128 = arith.addi %13, %c0_i32_38 : i32
      %c3_i32_39 = arith.constant 3 : i32
      %129 = arith.addi %128, %c3_i32_39 : i32
      %c1_i32_40 = arith.constant 1 : i32
      %130 = arith.addi %129, %c1_i32_40 : i32
      %131 = arith.index_cast %130 : i32 to index
      %132 = memref.load %arg4[%131] : memref<54xf32, #tpu.memory_space<smem>>
      %133 = vector.extract_strided_slice %127 {offsets = [0, 0, 0], sizes = [4, 16, 16], strides = [1, 1, 1]} : vector<6x16x16xf32> to vector<4x16x16xf32>
      %134 = vector.broadcast %132 : f32 to vector<4x16x16xf32>
      %135 = arith.mulf %134, %133 : vector<4x16x16xf32>
      %136 = arith.addf %126, %135 : vector<4x16x16xf32>
      %c9_i32_41 = arith.constant 9 : i32
      %137 = arith.addi %13, %c9_i32_41 : i32
      %c3_i32_42 = arith.constant 3 : i32
      %138 = arith.addi %137, %c3_i32_42 : i32
      %c1_i32_43 = arith.constant 1 : i32
      %139 = arith.addi %138, %c1_i32_43 : i32
      %140 = arith.index_cast %139 : i32 to index
      %141 = memref.load %arg4[%140] : memref<54xf32, #tpu.memory_space<smem>>
      %142 = vector.extract_strided_slice %127 {offsets = [1, 0, 0], sizes = [4, 16, 16], strides = [1, 1, 1]} : vector<6x16x16xf32> to vector<4x16x16xf32>
      %143 = vector.broadcast %141 : f32 to vector<4x16x16xf32>
      %144 = arith.mulf %143, %142 : vector<4x16x16xf32>
      %145 = arith.addf %136, %144 : vector<4x16x16xf32>
      %c18_i32_44 = arith.constant 18 : i32
      %146 = arith.addi %13, %c18_i32_44 : i32
      %c3_i32_45 = arith.constant 3 : i32
      %147 = arith.addi %146, %c3_i32_45 : i32
      %c1_i32_46 = arith.constant 1 : i32
      %148 = arith.addi %147, %c1_i32_46 : i32
      %149 = arith.index_cast %148 : i32 to index
      %150 = memref.load %arg4[%149] : memref<54xf32, #tpu.memory_space<smem>>
      %151 = vector.extract_strided_slice %127 {offsets = [2, 0, 0], sizes = [4, 16, 16], strides = [1, 1, 1]} : vector<6x16x16xf32> to vector<4x16x16xf32>
      %152 = vector.broadcast %150 : f32 to vector<4x16x16xf32>
      %153 = arith.mulf %152, %151 : vector<4x16x16xf32>
      %154 = arith.addf %145, %153 : vector<4x16x16xf32>
      %155 = vector.extract_strided_slice %12 {offsets = [0, 1, 2], sizes = [6, 16, 16], strides = [1, 1, 1]} : vector<6x18x18xf32> to vector<6x16x16xf32>
      %c0_i32_47 = arith.constant 0 : i32
      %156 = arith.addi %13, %c0_i32_47 : i32
      %c3_i32_48 = arith.constant 3 : i32
      %157 = arith.addi %156, %c3_i32_48 : i32
      %c2_i32_49 = arith.constant 2 : i32
      %158 = arith.addi %157, %c2_i32_49 : i32
      %159 = arith.index_cast %158 : i32 to index
      %160 = memref.load %arg4[%159] : memref<54xf32, #tpu.memory_space<smem>>
      %161 = vector.extract_strided_slice %155 {offsets = [0, 0, 0], sizes = [4, 16, 16], strides = [1, 1, 1]} : vector<6x16x16xf32> to vector<4x16x16xf32>
      %162 = vector.broadcast %160 : f32 to vector<4x16x16xf32>
      %163 = arith.mulf %162, %161 : vector<4x16x16xf32>
      %164 = arith.addf %154, %163 : vector<4x16x16xf32>
      %c9_i32_50 = arith.constant 9 : i32
      %165 = arith.addi %13, %c9_i32_50 : i32
      %c3_i32_51 = arith.constant 3 : i32
      %166 = arith.addi %165, %c3_i32_51 : i32
      %c2_i32_52 = arith.constant 2 : i32
      %167 = arith.addi %166, %c2_i32_52 : i32
      %168 = arith.index_cast %167 : i32 to index
      %169 = memref.load %arg4[%168] : memref<54xf32, #tpu.memory_space<smem>>
      %170 = vector.extract_strided_slice %155 {offsets = [1, 0, 0], sizes = [4, 16, 16], strides = [1, 1, 1]} : vector<6x16x16xf32> to vector<4x16x16xf32>
      %171 = vector.broadcast %169 : f32 to vector<4x16x16xf32>
      %172 = arith.mulf %171, %170 : vector<4x16x16xf32>
      %173 = arith.addf %164, %172 : vector<4x16x16xf32>
      %c18_i32_53 = arith.constant 18 : i32
      %174 = arith.addi %13, %c18_i32_53 : i32
      %c3_i32_54 = arith.constant 3 : i32
      %175 = arith.addi %174, %c3_i32_54 : i32
      %c2_i32_55 = arith.constant 2 : i32
      %176 = arith.addi %175, %c2_i32_55 : i32
      %177 = arith.index_cast %176 : i32 to index
      %178 = memref.load %arg4[%177] : memref<54xf32, #tpu.memory_space<smem>>
      %179 = vector.extract_strided_slice %155 {offsets = [2, 0, 0], sizes = [4, 16, 16], strides = [1, 1, 1]} : vector<6x16x16xf32> to vector<4x16x16xf32>
      %180 = vector.broadcast %178 : f32 to vector<4x16x16xf32>
      %181 = arith.mulf %180, %179 : vector<4x16x16xf32>
      %182 = arith.addf %173, %181 : vector<4x16x16xf32>
      %183 = vector.extract_strided_slice %12 {offsets = [0, 2, 0], sizes = [6, 16, 16], strides = [1, 1, 1]} : vector<6x18x18xf32> to vector<6x16x16xf32>
      %c0_i32_56 = arith.constant 0 : i32
      %184 = arith.addi %13, %c0_i32_56 : i32
      %c6_i32 = arith.constant 6 : i32
      %185 = arith.addi %184, %c6_i32 : i32
      %c0_i32_57 = arith.constant 0 : i32
      %186 = arith.addi %185, %c0_i32_57 : i32
      %187 = arith.index_cast %186 : i32 to index
      %188 = memref.load %arg4[%187] : memref<54xf32, #tpu.memory_space<smem>>
      %189 = vector.extract_strided_slice %183 {offsets = [0, 0, 0], sizes = [4, 16, 16], strides = [1, 1, 1]} : vector<6x16x16xf32> to vector<4x16x16xf32>
      %190 = vector.broadcast %188 : f32 to vector<4x16x16xf32>
      %191 = arith.mulf %190, %189 : vector<4x16x16xf32>
      %192 = arith.addf %182, %191 : vector<4x16x16xf32>
      %c9_i32_58 = arith.constant 9 : i32
      %193 = arith.addi %13, %c9_i32_58 : i32
      %c6_i32_59 = arith.constant 6 : i32
      %194 = arith.addi %193, %c6_i32_59 : i32
      %c0_i32_60 = arith.constant 0 : i32
      %195 = arith.addi %194, %c0_i32_60 : i32
      %196 = arith.index_cast %195 : i32 to index
      %197 = memref.load %arg4[%196] : memref<54xf32, #tpu.memory_space<smem>>
      %198 = vector.extract_strided_slice %183 {offsets = [1, 0, 0], sizes = [4, 16, 16], strides = [1, 1, 1]} : vector<6x16x16xf32> to vector<4x16x16xf32>
      %199 = vector.broadcast %197 : f32 to vector<4x16x16xf32>
      %200 = arith.mulf %199, %198 : vector<4x16x16xf32>
      %201 = arith.addf %192, %200 : vector<4x16x16xf32>
      %c18_i32_61 = arith.constant 18 : i32
      %202 = arith.addi %13, %c18_i32_61 : i32
      %c6_i32_62 = arith.constant 6 : i32
      %203 = arith.addi %202, %c6_i32_62 : i32
      %c0_i32_63 = arith.constant 0 : i32
      %204 = arith.addi %203, %c0_i32_63 : i32
      %205 = arith.index_cast %204 : i32 to index
      %206 = memref.load %arg4[%205] : memref<54xf32, #tpu.memory_space<smem>>
      %207 = vector.extract_strided_slice %183 {offsets = [2, 0, 0], sizes = [4, 16, 16], strides = [1, 1, 1]} : vector<6x16x16xf32> to vector<4x16x16xf32>
      %208 = vector.broadcast %206 : f32 to vector<4x16x16xf32>
      %209 = arith.mulf %208, %207 : vector<4x16x16xf32>
      %210 = arith.addf %201, %209 : vector<4x16x16xf32>
      %211 = vector.extract_strided_slice %12 {offsets = [0, 2, 1], sizes = [6, 16, 16], strides = [1, 1, 1]} : vector<6x18x18xf32> to vector<6x16x16xf32>
      %c0_i32_64 = arith.constant 0 : i32
      %212 = arith.addi %13, %c0_i32_64 : i32
      %c6_i32_65 = arith.constant 6 : i32
      %213 = arith.addi %212, %c6_i32_65 : i32
      %c1_i32_66 = arith.constant 1 : i32
      %214 = arith.addi %213, %c1_i32_66 : i32
      %215 = arith.index_cast %214 : i32 to index
      %216 = memref.load %arg4[%215] : memref<54xf32, #tpu.memory_space<smem>>
      %217 = vector.extract_strided_slice %211 {offsets = [0, 0, 0], sizes = [4, 16, 16], strides = [1, 1, 1]} : vector<6x16x16xf32> to vector<4x16x16xf32>
      %218 = vector.broadcast %216 : f32 to vector<4x16x16xf32>
      %219 = arith.mulf %218, %217 : vector<4x16x16xf32>
      %220 = arith.addf %210, %219 : vector<4x16x16xf32>
      %c9_i32_67 = arith.constant 9 : i32
      %221 = arith.addi %13, %c9_i32_67 : i32
      %c6_i32_68 = arith.constant 6 : i32
      %222 = arith.addi %221, %c6_i32_68 : i32
      %c1_i32_69 = arith.constant 1 : i32
      %223 = arith.addi %222, %c1_i32_69 : i32
      %224 = arith.index_cast %223 : i32 to index
      %225 = memref.load %arg4[%224] : memref<54xf32, #tpu.memory_space<smem>>
      %226 = vector.extract_strided_slice %211 {offsets = [1, 0, 0], sizes = [4, 16, 16], strides = [1, 1, 1]} : vector<6x16x16xf32> to vector<4x16x16xf32>
      %227 = vector.broadcast %225 : f32 to vector<4x16x16xf32>
      %228 = arith.mulf %227, %226 : vector<4x16x16xf32>
      %229 = arith.addf %220, %228 : vector<4x16x16xf32>
      %c18_i32_70 = arith.constant 18 : i32
      %230 = arith.addi %13, %c18_i32_70 : i32
      %c6_i32_71 = arith.constant 6 : i32
      %231 = arith.addi %230, %c6_i32_71 : i32
      %c1_i32_72 = arith.constant 1 : i32
      %232 = arith.addi %231, %c1_i32_72 : i32
      %233 = arith.index_cast %232 : i32 to index
      %234 = memref.load %arg4[%233] : memref<54xf32, #tpu.memory_space<smem>>
      %235 = vector.extract_strided_slice %211 {offsets = [2, 0, 0], sizes = [4, 16, 16], strides = [1, 1, 1]} : vector<6x16x16xf32> to vector<4x16x16xf32>
      %236 = vector.broadcast %234 : f32 to vector<4x16x16xf32>
      %237 = arith.mulf %236, %235 : vector<4x16x16xf32>
      %238 = arith.addf %229, %237 : vector<4x16x16xf32>
      %239 = vector.extract_strided_slice %12 {offsets = [0, 2, 2], sizes = [6, 16, 16], strides = [1, 1, 1]} : vector<6x18x18xf32> to vector<6x16x16xf32>
      %c0_i32_73 = arith.constant 0 : i32
      %240 = arith.addi %13, %c0_i32_73 : i32
      %c6_i32_74 = arith.constant 6 : i32
      %241 = arith.addi %240, %c6_i32_74 : i32
      %c2_i32_75 = arith.constant 2 : i32
      %242 = arith.addi %241, %c2_i32_75 : i32
      %243 = arith.index_cast %242 : i32 to index
      %244 = memref.load %arg4[%243] : memref<54xf32, #tpu.memory_space<smem>>
      %245 = vector.extract_strided_slice %239 {offsets = [0, 0, 0], sizes = [4, 16, 16], strides = [1, 1, 1]} : vector<6x16x16xf32> to vector<4x16x16xf32>
      %246 = vector.broadcast %244 : f32 to vector<4x16x16xf32>
      %247 = arith.mulf %246, %245 : vector<4x16x16xf32>
      %248 = arith.addf %238, %247 : vector<4x16x16xf32>
      %c9_i32_76 = arith.constant 9 : i32
      %249 = arith.addi %13, %c9_i32_76 : i32
      %c6_i32_77 = arith.constant 6 : i32
      %250 = arith.addi %249, %c6_i32_77 : i32
      %c2_i32_78 = arith.constant 2 : i32
      %251 = arith.addi %250, %c2_i32_78 : i32
      %252 = arith.index_cast %251 : i32 to index
      %253 = memref.load %arg4[%252] : memref<54xf32, #tpu.memory_space<smem>>
      %254 = vector.extract_strided_slice %239 {offsets = [1, 0, 0], sizes = [4, 16, 16], strides = [1, 1, 1]} : vector<6x16x16xf32> to vector<4x16x16xf32>
      %255 = vector.broadcast %253 : f32 to vector<4x16x16xf32>
      %256 = arith.mulf %255, %254 : vector<4x16x16xf32>
      %257 = arith.addf %248, %256 : vector<4x16x16xf32>
      %c18_i32_79 = arith.constant 18 : i32
      %258 = arith.addi %13, %c18_i32_79 : i32
      %c6_i32_80 = arith.constant 6 : i32
      %259 = arith.addi %258, %c6_i32_80 : i32
      %c2_i32_81 = arith.constant 2 : i32
      %260 = arith.addi %259, %c2_i32_81 : i32
      %261 = arith.index_cast %260 : i32 to index
      %262 = memref.load %arg4[%261] : memref<54xf32, #tpu.memory_space<smem>>
      %263 = vector.extract_strided_slice %239 {offsets = [2, 0, 0], sizes = [4, 16, 16], strides = [1, 1, 1]} : vector<6x16x16xf32> to vector<4x16x16xf32>
      %264 = vector.broadcast %262 : f32 to vector<4x16x16xf32>
      %265 = arith.mulf %264, %263 : vector<4x16x16xf32>
      %266 = arith.addf %257, %265 : vector<4x16x16xf32>
      %c0_82 = arith.constant 0 : index
      %c0_83 = arith.constant 0 : index
      %c0_84 = arith.constant 0 : index
      %c0_85 = arith.constant 0 : index
      %267 = vector.load %arg7[%c0_82, %c0_83, %c0_84, %c0_85] : memref<1x4x16x16xf32, #tpu.memory_space<vmem>>, vector<1x4x16x16xf32>
      %268 = vector.shape_cast %267 : vector<1x4x16x16xf32> to vector<4x16x16xf32>
      %269 = arith.addf %268, %266 : vector<4x16x16xf32>
      %c0_86 = arith.constant 0 : index
      %c0_87 = arith.constant 0 : index
      %c0_88 = arith.constant 0 : index
      %c0_89 = arith.constant 0 : index
      %270 = vector.load %arg7[%c0_86, %c0_87, %c0_88, %c0_89] : memref<1x4x16x16xf32, #tpu.memory_space<vmem>>, vector<1x4x16x16xf32>
      %271 = vector.shape_cast %270 : vector<1x4x16x16xf32> to vector<4x16x16xf32>
      %272 = vector.shape_cast %269 : vector<4x16x16xf32> to vector<1x4x16x16xf32>
      tpu.vector_store %arg7[%c0_86, %c0_87, %c0_88, %c0_89], %272 {strides = array<i32>} : memref<1x4x16x16xf32, #tpu.memory_space<vmem>>, vector<1x4x16x16xf32>,
    } else {
    }
    %c1_i32 = arith.constant 1 : i32
    %8 = arith.cmpi eq, %arg1, %c1_i32 : i32
    %9 = arith.extui %8 : i1 to i32
    %c0_i32_2 = arith.constant 0 : i32
    %10 = arith.cmpi ne, %9, %c0_i32_2 : i32
    scf.if %10 {
      %c0 = arith.constant 0 : index
      %c0_3 = arith.constant 0 : index
      %c0_4 = arith.constant 0 : index
      %c0_5 = arith.constant 0 : index
      %11 = vector.load %arg7[%c0, %c0_3, %c0_4, %c0_5] : memref<1x4x16x16xf32, #tpu.memory_space<vmem>>, vector<1x4x16x16xf32>
      %12 = vector.shape_cast %11 : vector<1x4x16x16xf32> to vector<4x16x16xf32>
      %c0_6 = arith.constant 0 : index
      %13 = memref.load %arg5[%c0_6] : memref<1xf32, #tpu.memory_space<smem>>
      %14 = vector.broadcast %13 : f32 to vector<4x16x16xf32>
      %15 = arith.addf %12, %14 : vector<4x16x16xf32>
      %cst = arith.constant 0.000000e+00 : f32
      %16 = vector.broadcast %cst : f32 to vector<4x16x16xf32>
      %17 = arith.maximumf %15, %16 : vector<4x16x16xf32>
      %c0_7 = arith.constant 0 : index
      %c0_8 = arith.constant 0 : index
      %c0_9 = arith.constant 0 : index
      %c0_10 = arith.constant 0 : index
      %18 = vector.load %arg7[%c0_7, %c0_8, %c0_9, %c0_10] : memref<1x4x16x16xf32, #tpu.memory_space<vmem>>, vector<1x4x16x16xf32>
      %19 = vector.shape_cast %18 : vector<1x4x16x16xf32> to vector<4x16x16xf32>
      %20 = vector.shape_cast %17 : vector<4x16x16xf32> to vector<1x4x16x16xf32>
      tpu.vector_store %arg7[%c0_7, %c0_8, %c0_9, %c0_10], %20 {strides = array<i32>} : memref<1x4x16x16xf32, #tpu.memory_space<vmem>>, vector<1x4x16x16xf32>,
    } else {
    }
    return
  }
  func.func @transform_0(%arg0: i32, %arg1: i32, %arg2: memref<2xi32, #tpu.memory_space<smem>>, %arg3: memref<2xi32, #tpu.memory_space<smem>>) -> i32 {
    %c0_i32 = arith.constant 0 : i32
    %c0_i32_0 = arith.constant 0 : i32
    return %c0_i32 : i32
  }
  func.func @transform_1(%arg0: i32, %arg1: i32, %arg2: memref<2xi32, #tpu.memory_space<smem>>, %arg3: memref<2xi32, #tpu.memory_space<smem>>) -> i32 {
    %c0_i32 = arith.constant 0 : i32
    %c0_i32_0 = arith.constant 0 : i32
    return %c0_i32 : i32
  }
  func.func @transform_2(%arg0: i32, %arg1: i32, %arg2: memref<2xi32, #tpu.memory_space<smem>>, %arg3: memref<2xi32, #tpu.memory_space<smem>>) -> (i32, i32, i32, i32) {
    %0 = arith.index_cast %arg0 : i32 to index
    %1 = memref.load %arg3[%0] : memref<2xi32, #tpu.memory_space<smem>>
    %2 = arith.index_cast %arg0 : i32 to index
    %3 = memref.load %arg2[%2] : memref<2xi32, #tpu.memory_space<smem>>
    %c1_i32 = arith.constant 1 : i32
    %4 = arith.subi %3, %c1_i32 : i32
    %5 = arith.minsi %arg1, %4 : i32
    %6 = arith.addi %1, %5 : i32
    %c0_i32 = arith.constant 0 : i32
    %c0_i32_0 = arith.constant 0 : i32
    %c0_i32_1 = arith.constant 0 : i32
    %c0_i32_2 = arith.constant 0 : i32
    return %6, %c0_i32, %c0_i32_0, %c0_i32_1 : i32, i32, i32, i32
  }
  func.func @transform_3(%arg0: i32, %arg1: i32, %arg2: memref<2xi32, #tpu.memory_space<smem>>, %arg3: memref<2xi32, #tpu.memory_space<smem>>) -> (i32, i32, i32, i32) {
    %c0_i32 = arith.constant 0 : i32
    %c0_i32_0 = arith.constant 0 : i32
    %c0_i32_1 = arith.constant 0 : i32
    %c0_i32_2 = arith.constant 0 : i32
    return %arg0, %c0_i32, %c0_i32_0, %c0_i32_1 : i32, i32, i32, i32
  }
}

</mosaic_0001>

<llo_original>
// kernel: dfusion_forward.1
$region0: #{dfusion_forward.1}
  #allocation0 [shape = 'u32[]', space=smem, size = 0x4, offset = 0x4, fixed_abs, tag = 'smem constant byte address 0x4 - core index']
  #allocation1 [shape = 'u32[72,128]{1,0:T(1,128)}', space=vmem, size = 0x9000, scoped, tag = 'internal scratch']
  #allocation2 [shape = 's32[1]{0}', space=sflag, size = 0x4, scoped, tag = 'scoped memory for dfusion_forward.1']
  #allocation3 [shape = 'u8[512]{0}', space=smem, size = 0x200, scoped, tag = 'prefetched SMEM operand 0']
  #allocation4 [shape = 'u8[512]{0}', space=smem, size = 0x200, scoped, tag = 'prefetched SMEM operand 1']
  #allocation5 [shape = 'f32[1]{0:T(128)S(6)}', space=smem, size = 0x200, scoped, tag = 'scoped memory for dfusion_forward.1']
  %s0 = inlined_call_operand.vmem [shape: s32[2], index: 0, kind: input, shape index: {}]
  %s1 = inlined_call_operand.vmem [shape: s32[2], index: 1, kind: input, shape index: {}]
  %s2 = inlined_call_operand.vmem [shape: f32[54], index: 2, kind: input, shape index: {}]
  %s3 = inlined_call_operand.<no memory space> [shape: f32[1], index: 3, kind: input, shape index: {}]
  %s4 = inlined_call_operand.vmem [shape: f32[3,6,18,18], index: 4, kind: input, shape index: {}]
  %s5 = inlined_call_operand.hbm [shape: f32[2,4,16,16], index: 5, kind: output, shape index: {}]
  %s6 = sld [smem:[#allocation0]]
  $region61: #{dfusion_forward.1} parent=0
    _
  %s8 = ssub.s32 1, %s6
  %s9 = scalar_select 0, %s8, %s6
  %s11 = sshll.u32 %s0, 4
  %s12 = int_to_ptr.vmem [resolvable:$true] %s11
  %14 = dma.vmem_to_smem %s12, 16, [#allocation3], [#allocation2]
  %s16 = sshll.u32 %s1, 4
  %s17 = int_to_ptr.vmem [resolvable:$true] %s16
  %19 = dma.vmem_to_smem %s17, 16, [#allocation4], [#allocation2]
  %20 = sst [smem:[#allocation5]] %s3
  %22 = dma.done [#allocation2], 32
  %23 = sfence
  $region1: #{dfusion_forward.1} parent=0
    #allocation6 [shape = 'u8[512]{0}', space=smem, size = 0x200, scoped, tag = 'input window, operand 2, single buffered']
    #allocation7 [shape = 's32[2]{0}', space=sflag, size = 0x8, scoped, tag = 'scoped memory for dfusion_forward.1']
    #allocation8 [shape = 's32[2]{0}', space=sflag, size = 0x8, scoped, tag = 'scoped memory for dfusion_forward.1']
    #allocation9 [shape = 'u8[65536]{0}', space=vmem, size = 0x10000, scoped, tag = 'output window, operand 0']
    %24 = vsyncpa [#allocation8], 0
    %25 = vsyncpa [#allocation7], 0
    %s26 = scalar_lea.sflag [#allocation7], 1
    %27 = vsyncpa %s26, 0
    loop: start=0, step=1, limit=6
    $region2: #{dfusion_forward.1} parent=1 // loop_pre_header
      _
    $region3: #{dfusion_forward.1} parent=1 // loop_header
      %s29 = sphi 0, %s33
      %p30 = scmp.ge.s32.totalorder %s29, 6
      %s36 = sphi 0, %s48
      %s37 = sphi 0, %s44
      %s38 = sphi 0, %s36
      %s39 = sphi 0, %s37
      %s40 = sphi 0, %s38
      %s41 = sphi 0, %s39
      %s49 = sphi 0, %s49
      %s51 = sphi 0, %s49
      %s52 = sphi 0, %s51
      %s66 = sphi 0, %s52
      %s70 = sphi 0, %s70
      %s72 = sphi 0, %s70
      %s73 = sphi 0, %s72
      %s87 = sphi 0, %s73
      %s105 = sphi 0, %s107
      %s108 = sphi 0, %s105
      %s109 = sphi 0, %s108
      %s125 = sphi 0, %s109
      %s131 = sphi 0, %s133
      %s134 = sphi 0, %s131
      %s135 = sphi 0, %s134
      %s151 = sphi 0, %s135
    $region4: #{dfusion_forward.1} parent=1 // loop_header_branch
      %32 = sbr.rel (%p30) target = $region8
    $region5: #{dfusion_forward.1} parent=1 // loop_body
      %s34 = ssub.s32 %s29, 1
      %s35 = ssub.s32 %s29, 2
      %s42 = sadd.s32 1, %s37
      %p43 = scmp.ge.s32.totalorder %s42, 2
      %s44 = scalar_select %p43, 0, %s42
      %s45 = sadd.s32 1, %s36
      %s46 = scalar_select %p43, %s45, %s36
      %p47 = scmp.ge.s32.totalorder %s46, 2
      %s48 = scalar_select %p47, 0, %s46
      %s50 = sadd.s32 %s49, 1
      %p53 = scmp.eq.s32.totalorder %s29, 3
      %p54 = scmp.ne.s32.totalorder %s49, %s51
      %p55 = scmp.eq.s32.totalorder %s29, 0
      %p56 = por %p54, %p55
      %p57 = scmp.ne.s32.totalorder %s49, %s51
      %p58 = scmp.eq.s32.totalorder %s34, 3
      %p59 = por %p57, %p58
      %p60 = scmp.ne.s32.totalorder %s51, %s52
      %p61 = scmp.eq.s32.totalorder %s34, 0
      %p62 = por %p60, %p61
      %p63 = scmp.ne.s32.totalorder %s51, %s52
      %p64 = scmp.eq.s32.totalorder %s35, 3
      %p65 = por %p63, %p64
      %p67 = scmp.ne.s32.totalorder %s52, %s66
      %p68 = scmp.eq.s32.totalorder %s35, 0
      %p69 = por %p67, %p68
      %s71 = sadd.s32 %s70, 1
      %p74 = scmp.eq.s32.totalorder %s29, 3
      %p75 = scmp.ne.s32.totalorder %s70, %s72
      %p76 = scmp.eq.s32.totalorder %s29, 0
      %p77 = por %p75, %p76
      %p78 = scmp.ne.s32.totalorder %s70, %s72
      %p79 = scmp.eq.s32.totalorder %s34, 3
      %p80 = por %p78, %p79
      %p81 = scmp.ne.s32.totalorder %s72, %s73
      %p82 = scmp.eq.s32.totalorder %s34, 0
      %p83 = por %p81, %p82
      %p84 = scmp.ne.s32.totalorder %s72, %s73
      %p85 = scmp.eq.s32.totalorder %s35, 3
      %p86 = por %p84, %p85
      %p88 = scmp.ne.s32.totalorder %s73, %s87
      %p89 = scmp.eq.s32.totalorder %s35, 0
      %p90 = por %p88, %p89
      %s91 = sld [smem:[#allocation4 + %s36]]
      %s92 = sld [smem:[#allocation3 + %s36]]
      %s93 = ssub.s32 %s92, 1
      %p94 = scmp.lt.s32.totalorder %s37, %s93
      %s95 = scalar_select %p94, %s37, %s93
      %s96 = sadd.s32 %s91, %s95
      %s97 = sld [smem:[#allocation4 + %s48]]
      %s98 = sld [smem:[#allocation3 + %s48]]
      %s99 = ssub.s32 %s98, 1
      %p100 = scmp.lt.s32.totalorder %s44, %s99
      %s101 = scalar_select %p100, %s44, %s99
      %s102 = sadd.s32 %s97, %s101
      %s103 = ssub.s32 %s96, %s102
      %p104 = scmp.eq.s32.totalorder %s103, 0
      %s106 = sadd.s32 %s105, 1
      %s107 = scalar_select %p104, %s105, %s106
      %p110 = pneg %p104
      %p111 = scmp.eq.s32.totalorder %s29, 3
      %p112 = por %p110, %p111
      %p113 = scmp.ne.s32.totalorder %s105, %s108
      %p114 = scmp.eq.s32.totalorder %s29, 0
      %p115 = por %p113, %p114
      %p116 = scmp.ne.s32.totalorder %s105, %s108
      %p117 = scmp.eq.s32.totalorder %s34, 3
      %p118 = por %p116, %p117
      %p119 = scmp.ne.s32.totalorder %s108, %s109
      %p120 = scmp.eq.s32.totalorder %s34, 0
      %p121 = por %p119, %p120
      %p122 = scmp.ne.s32.totalorder %s108, %s109
      %p123 = scmp.eq.s32.totalorder %s35, 3
      %p124 = por %p122, %p123
      %p126 = scmp.ne.s32.totalorder %s109, %s125
      %p127 = scmp.eq.s32.totalorder %s35, 0
      %p128 = por %p126, %p127
      %s129 = ssub.s32 %s36, %s48
      %p130 = scmp.eq.s32.totalorder %s129, 0
      %s132 = sadd.s32 %s131, 1
      %s133 = scalar_select %p130, %s131, %s132
      %p136 = pneg %p130
      %p137 = scmp.eq.s32.totalorder %s29, 3
      %p138 = por %p136, %p137
      %p139 = scmp.ne.s32.totalorder %s131, %s134
      %p140 = scmp.eq.s32.totalorder %s29, 0
      %p141 = por %p139, %p140
      %p142 = scmp.ne.s32.totalorder %s131, %s134
      %p143 = scmp.eq.s32.totalorder %s34, 3
      %p144 = por %p142, %p143
      %p145 = scmp.ne.s32.totalorder %s134, %s135
      %p146 = scmp.eq.s32.totalorder %s34, 0
      %p147 = por %p145, %p146
      %p148 = scmp.ne.s32.totalorder %s134, %s135
      %p149 = scmp.eq.s32.totalorder %s35, 3
      %p150 = por %p148, %p149
      %p152 = scmp.ne.s32.totalorder %s135, %s151
      %p153 = scmp.eq.s32.totalorder %s35, 0
      %p154 = por %p152, %p153
      %p155 = scmp.le.s32.totalorder 1, %s29
      %p156 = scmp.lt.s32.totalorder %s29, 5
      %p157 = pnand %p155, %p156
      %p158 = pneg %p157
      // Predicated region
      $region9: #{dfusion_forward.1} parent=5 // pred_check
        _
      $region10: #{dfusion_forward.1} parent=5 // pred_check_branch
        %160 = sbr.rel (%p157) target = $region12
      $region11: #{dfusion_forward.1} parent=5 // pred_region
        %s161 = ssub.s32 %s29, 1
        // Predicated region
        $region13: #{dfusion_forward.1} parent=11 // pred_check
          %p162 = pneg %p62
        $region14: #{dfusion_forward.1} parent=11 // pred_check_branch
          %164 = sbr.rel (%p162) target = $region16
        $region15: #{dfusion_forward.1} parent=11 // pred_region
          %166 = vsyncadd [#allocation8], 0
          %s168 = sshll.u32 %s2, 4
          %s169 = int_to_ptr.vmem [resolvable:$true] %s168
          %171 = dma.vmem_to_smem %s169, 16, [#allocation6], [#allocation8]
        $region16: #{dfusion_forward.1} parent=11 // pred_fallthru
          _
        // Predicated region
        $region17: #{dfusion_forward.1} parent=11 // pred_check
          %p172 = pneg %p83
        $region18: #{dfusion_forward.1} parent=11 // pred_check_branch
          %174 = sbr.rel (%p172) target = $region20
        $region19: #{dfusion_forward.1} parent=11 // pred_region
          _
        $region20: #{dfusion_forward.1} parent=11 // pred_fallthru
          _
      $region12: #{dfusion_forward.1} parent=5 // pred_fallthru
        _
      %p175 = scmp.lt.s32.totalorder %s29, 4
      // Predicated region
      $region21: #{dfusion_forward.1} parent=5 // pred_check
        %p176 = pneg %p175
      $region22: #{dfusion_forward.1} parent=5 // pred_check_branch
        %178 = sbr.rel (%p176) target = $region24
      $region23: #{dfusion_forward.1} parent=5 // pred_region
        // Predicated region
        $region25: #{dfusion_forward.1} parent=23 // pred_check
          %p179 = pneg %p115
        $region26: #{dfusion_forward.1} parent=23 // pred_check_branch
          %181 = sbr.rel (%p179) target = $region28
        $region27: #{dfusion_forward.1} parent=23 // pred_region
          %s182 = sld [smem:[#allocation4 + %s36]]
          %s183 = sld [smem:[#allocation3 + %s36]]
          %s184 = ssub.s32 %s183, 1
          %p185 = scmp.lt.s32.totalorder %s37, %s184
          %s186 = scalar_select %p185, %s37, %s184
          %s187 = sadd.s32 %s182, %s186
          %p188 = scmp.lt.s32.totalorder %s187, 2
          %s189 = scalar_select %p188, %s187, 2
          %s190 = smul.addr %s189, 18
          %s191 = smul.addr %s190, 8
          %s192 = scalar_lea.vmem %s4, %s191
          %s193 = sld [smem:[#allocation4 + %s36]]
          %s194 = sld [smem:[#allocation3 + %s36]]
          %s195 = ssub.s32 %s194, 1
          %p196 = scmp.lt.s32.totalorder %s37, %s195
          %s197 = scalar_select %p196, %s37, %s195
          %s198 = sadd.s32 %s193, %s197
        $region28: #{dfusion_forward.1} parent=23 // pred_fallthru
          _
      $region24: #{dfusion_forward.1} parent=5 // pred_fallthru
        _
      %p199 = scmp.le.s32.totalorder 1, %s29
      %p200 = scmp.lt.s32.totalorder %s29, 5
      %p201 = pnand %p199, %p200
      %p202 = pneg %p201
      // Predicated region
      $region29: #{dfusion_forward.1} parent=5 // pred_check
        _
      $region30: #{dfusion_forward.1} parent=5 // pred_check_branch
        %204 = sbr.rel (%p201) target = $region32
      $region31: #{dfusion_forward.1} parent=5 // pred_region
        %s205 = ssub.s32 %s29, 1
        // Predicated region
        $region33: #{dfusion_forward.1} parent=31 // pred_check
          %p206 = pneg %p62
        $region34: #{dfusion_forward.1} parent=31 // pred_check_branch
          %208 = sbr.rel (%p206) target = $region36
        $region35: #{dfusion_forward.1} parent=31 // pred_region
          %210 = dma.done [#allocation8], 16
        $region36: #{dfusion_forward.1} parent=31 // pred_fallthru
          _
        %211 = sfence
        %p212 = pneg %p62
        %p213 = pneg %p59
        %p214 = pneg %p83
        %p215 = pneg %p80
        %s216 = sld [smem:[#allocation4 + %s38]]
        %s217 = sld [smem:[#allocation3 + %s38]]
        %s218 = ssub.s32 %s217, 1
        %p219 = scmp.lt.s32.totalorder %s39, %s218
        %s220 = scalar_select %p219, %s39, %s218
        %s221 = sadd.s32 %s216, %s220
        %p222 = scmp.lt.s32.totalorder %s221, 2
        %s223 = scalar_select %p222, %s221, 2
        %s224 = smul.addr %s223, 18
        %s225 = smul.addr %s224, 8
        %s226 = scalar_lea.vmem %s4, %s225
        %p227 = pneg %p121
        %p228 = pneg %p118
        %p229 = pneg %p147
        %p230 = pneg %p144
        %s231 = sand.u32 %s134, 1
        %s232 = scalar_lea.sflag [#allocation7], %s231
        %s233 = sand.u32 %s134, 1
        %s234 = smul.addr %s233, 64
        %s235 = scalar_lea.vmem [#allocation9], %s234
        %s236 = sld [smem:[#allocation4 + %s38]]
        %s237 = sld [smem:[#allocation3 + %s38]]
        %s238 = ssub.s32 %s237, 1
        %p239 = scmp.lt.s32.totalorder %s39, %s238
        %s240 = scalar_select %p239, %s39, %s238
        %s241 = sadd.s32 %s236, %s240
        %p242 = scmp.lt.s32.totalorder %s241, 2
        %s243 = scalar_select %p242, %s241, 2
        %s244 = smul.addr %s243, 18
        %s245 = smul.addr %s244, 8
        %s246 = scalar_lea.vmem %s4, %s245
        %s247 = sld [smem:[#allocation4 + %s38]]
        %s248 = sld [smem:[#allocation3 + %s38]]
        %s249 = ssub.s32 %s248, 1
        %p250 = scmp.lt.s32.totalorder %s39, %s249
        %s251 = scalar_select %p250, %s39, %s249
        %s252 = sadd.s32 %s247, %s251
        %p253 = scmp.eq.s32.totalorder %s39, 0
        // Predicated region
        $region37: #{dfusion_forward.1} parent=31 // pred_check
          %p254 = pneg %p253
        $region38: #{dfusion_forward.1} parent=31 // pred_check_branch
          %256 = sbr.rel (%p254) target = $region40
        $region39: #{dfusion_forward.1} parent=31 // pred_region
          %vm257 = vcmask 130048
          %258 = vst.msk [vmem:[%s235] sm:$0xff] %vm257, 0.0
          %259 = vst.msk [vmem:[%s235 + $0x8] sm:$0xff] %vm257, 0.0
          %260 = vst.msk [vmem:[%s235 + $0x10] sm:$0xff] %vm257, 0.0
          %261 = vst.msk [vmem:[%s235 + $0x18] sm:$0xff] %vm257, 0.0
          %262 = vst.msk [vmem:[%s235 + $0x20] sm:$0xff] %vm257, 0.0
          %263 = vst.msk [vmem:[%s235 + $0x28] sm:$0xff] %vm257, 0.0
          %264 = vst.msk [vmem:[%s235 + $0x30] sm:$0xff] %vm257, 0.0
          %265 = vst.msk [vmem:[%s235 + $0x38] sm:$0xff] %vm257, 0.0
        $region40: #{dfusion_forward.1} parent=31 // pred_fallthru
          _
        %s266 = sld [smem:[#allocation3 + %s38]]
        %p267 = scmp.lt.s32.totalorder %s39, %s266
        // Predicated region
        $region41: #{dfusion_forward.1} parent=31 // pred_check
          %p268 = pneg %p267
        $region42: #{dfusion_forward.1} parent=31 // pred_check_branch
          %270 = sbr.rel (%p268) target = $region44
        $region43: #{dfusion_forward.1} parent=31 // pred_region
          %v271 = vld [vmem:[%s246] sm:$0xff]
          %v272 = vld [vmem:[%s246 + $0x8] sm:$0xff]
          %v273 = vld [vmem:[%s246 + $0x10] sm:$0x3]
          %v274 = vld [vmem:[%s246 + $0x18] sm:$0xff]
          %v275 = vld [vmem:[%s246 + $0x20] sm:$0xff]
          %v276 = vld [vmem:[%s246 + $0x28] sm:$0x3]
          %v277 = vld [vmem:[%s246 + $0x30] sm:$0xff]
          %v278 = vld [vmem:[%s246 + $0x38] sm:$0xff]
          %v279 = vld [vmem:[%s246 + $0x40] sm:$0x3]
          %v280 = vld [vmem:[%s246 + $0x48] sm:$0xff]
          %v281 = vld [vmem:[%s246 + $0x50] sm:$0xff]
          %v282 = vld [vmem:[%s246 + $0x58] sm:$0x3]
          %v283 = vld [vmem:[%s246 + $0x60] sm:$0xff]
          %v284 = vld [vmem:[%s246 + $0x68] sm:$0xff]
          %v285 = vld [vmem:[%s246 + $0x70] sm:$0x3]
          %v286 = vld [vmem:[%s246 + $0x78] sm:$0xff]
          %v287 = vld [vmem:[%s246 + $0x80] sm:$0xff]
          %v288 = vld [vmem:[%s246 + $0x88] sm:$0x3]
          %s289 = smul.u32 %s39, 27
          %s290 = sld [smem:[#allocation6 + %s289]]
          %v291 = vstv %s290
          %v292 = vmul.f32 %v291, %v271
          %v293 = vmul.f32 %v291, %v272
          %v294 = vmul.f32 %v291, %v274
          %v295 = vmul.f32 %v291, %v275
          %v296 = vmul.f32 %v291, %v277
          %v297 = vmul.f32 %v291, %v278
          %v298 = vmul.f32 %v291, %v280
          %v299 = vmul.f32 %v291, %v281
          %v300 = vadd.f32 %v292, 0.0
          %v301 = vadd.f32 %v293, 0.0
          %v302 = vadd.f32 %v294, 0.0
          %v303 = vadd.f32 %v295, 0.0
          %v304 = vadd.f32 %v296, 0.0
          %v305 = vadd.f32 %v297, 0.0
          %v306 = vadd.f32 %v298, 0.0
          %v307 = vadd.f32 %v299, 0.0
          %s308 = sadd.s32 %s289, 9
          %s309 = sld [smem:[#allocation6 + %s308]]
          %v310 = vstv %s309
          %v311 = vmul.f32 %v310, %v274
          %v312 = vmul.f32 %v310, %v275
          %v313 = vmul.f32 %v310, %v277
          %v314 = vmul.f32 %v310, %v278
          %v315 = vmul.f32 %v310, %v280
          %v316 = vmul.f32 %v310, %v281
          %v317 = vmul.f32 %v310, %v283
          %v318 = vmul.f32 %v310, %v284
          %v319 = vadd.f32 %v300, %v311
          %v320 = vadd.f32 %v301, %v312
          %v321 = vadd.f32 %v302, %v313
          %v322 = vadd.f32 %v303, %v314
          %v323 = vadd.f32 %v304, %v315
          %v324 = vadd.f32 %v305, %v316
          %v325 = vadd.f32 %v306, %v317
          %v326 = vadd.f32 %v307, %v318
          %s327 = sadd.s32 %s289, 18
          %s328 = sld [smem:[#allocation6 + %s327]]
          %v329 = vstv %s328
          %v330 = vmul.f32 %v329, %v277
          %v331 = vmul.f32 %v329, %v278
          %v332 = vmul.f32 %v329, %v280
          %v333 = vmul.f32 %v329, %v281
          %v334 = vmul.f32 %v329, %v283
          %v335 = vmul.f32 %v329, %v284
          %v336 = vmul.f32 %v329, %v286
          %v337 = vmul.f32 %v329, %v287
          %v338 = vadd.f32 %v319, %v330
          %v339 = vadd.f32 %v320, %v331
          %v340 = vadd.f32 %v321, %v332
          %v341 = vadd.f32 %v322, %v333
          %v342 = vadd.f32 %v323, %v334
          %v343 = vadd.f32 %v324, %v335
          %v344 = vadd.f32 %v325, %v336
          %v345 = vadd.f32 %v326, %v337
          %s346 = sadd.s32 %s289, 1
          %s347 = sld [smem:[#allocation6 + %s346]]
          %v348 = vstv %s347
          %v349 = vmul.f32 %v348, %v271
          %v350 = vmul.f32 %v348, %v272
          %v351 = vmul.f32 %v348, %v274
          %v352 = vmul.f32 %v348, %v275
          %v353 = vmul.f32 %v348, %v277
          %v354 = vmul.f32 %v348, %v278
          %v355 = vmul.f32 %v348, %v280
          %v356 = vmul.f32 %v348, %v281
          %365 = vrot.lane.b32.xlu0 %v349, 127
          %v366 = vpop.permute.xlu0 %365
          %367 = vrot.lane.b32.xlu0 %v350, 127
          %v368 = vpop.permute.xlu0 %367
          %369 = vrot.lane.b32.xlu0 %v351, 127
          %v370 = vpop.permute.xlu0 %369
          %371 = vrot.lane.b32.xlu0 %v352, 127
          %v372 = vpop.permute.xlu0 %371
          %373 = vrot.lane.b32.xlu0 %v353, 127
          %v374 = vpop.permute.xlu0 %373
          %375 = vrot.lane.b32.xlu0 %v354, 127
          %v376 = vpop.permute.xlu0 %375
          %377 = vrot.lane.b32.xlu0 %v355, 127
          %v378 = vpop.permute.xlu0 %377
          %379 = vrot.lane.b32.xlu0 %v356, 127
          %v380 = vpop.permute.xlu0 %379
          %v389 = vadd.f32 %v338, %v366
          %v390 = vadd.f32 %v339, %v368
          %v391 = vadd.f32 %v340, %v370
          %v392 = vadd.f32 %v341, %v372
          %v393 = vadd.f32 %v342, %v374
          %v394 = vadd.f32 %v343, %v376
          %v395 = vadd.f32 %v344, %v378
          %v396 = vadd.f32 %v345, %v380
          %s397 = sadd.s32 %s289, 10
          %s398 = sld [smem:[#allocation6 + %s397]]
          %v399 = vstv %s398
          %v400 = vmul.f32 %v399, %v274
          %v401 = vmul.f32 %v399, %v275
          %v402 = vmul.f32 %v399, %v277
          %v403 = vmul.f32 %v399, %v278
          %v404 = vmul.f32 %v399, %v280
          %v405 = vmul.f32 %v399, %v281
          %v406 = vmul.f32 %v399, %v283
          %v407 = vmul.f32 %v399, %v284
          %416 = vrot.lane.b32.xlu0 %v400, 127
          %v417 = vpop.permute.xlu0 %416
          %418 = vrot.lane.b32.xlu0 %v401, 127
          %v419 = vpop.permute.xlu0 %418
          %420 = vrot.lane.b32.xlu0 %v402, 127
          %v421 = vpop.permute.xlu0 %420
          %422 = vrot.lane.b32.xlu0 %v403, 127
          %v423 = vpop.permute.xlu0 %422
          %424 = vrot.lane.b32.xlu0 %v404, 127
          %v425 = vpop.permute.xlu0 %424
          %426 = vrot.lane.b32.xlu0 %v405, 127
          %v427 = vpop.permute.xlu0 %426
          %428 = vrot.lane.b32.xlu0 %v406, 127
          %v429 = vpop.permute.xlu0 %428
          %430 = vrot.lane.b32.xlu0 %v407, 127
          %v431 = vpop.permute.xlu0 %430
          %v440 = vadd.f32 %v389, %v417
          %v441 = vadd.f32 %v390, %v419
          %v442 = vadd.f32 %v391, %v421
          %v443 = vadd.f32 %v392, %v423
          %v444 = vadd.f32 %v393, %v425
          %v445 = vadd.f32 %v394, %v427
          %v446 = vadd.f32 %v395, %v429
          %v447 = vadd.f32 %v396, %v431
          %s448 = sadd.s32 %s289, 19
          %s449 = sld [smem:[#allocation6 + %s448]]
          %v450 = vstv %s449
          %v451 = vmul.f32 %v450, %v277
          %v452 = vmul.f32 %v450, %v278
          %v453 = vmul.f32 %v450, %v280
          %v454 = vmul.f32 %v450, %v281
          %v455 = vmul.f32 %v450, %v283
          %v456 = vmul.f32 %v450, %v284
          %v457 = vmul.f32 %v450, %v286
          %v458 = vmul.f32 %v450, %v287
          %467 = vrot.lane.b32.xlu0 %v451, 127
          %v468 = vpop.permute.xlu0 %467
          %469 = vrot.lane.b32.xlu0 %v452, 127
          %v470 = vpop.permute.xlu0 %469
          %471 = vrot.lane.b32.xlu0 %v453, 127
          %v472 = vpop.permute.xlu0 %471
          %473 = vrot.lane.b32.xlu0 %v454, 127
          %v474 = vpop.permute.xlu0 %473
          %475 = vrot.lane.b32.xlu0 %v455, 127
          %v476 = vpop.permute.xlu0 %475
          %477 = vrot.lane.b32.xlu0 %v456, 127
          %v478 = vpop.permute.xlu0 %477
          %479 = vrot.lane.b32.xlu0 %v457, 127
          %v480 = vpop.permute.xlu0 %479
          %481 = vrot.lane.b32.xlu0 %v458, 127
          %v482 = vpop.permute.xlu0 %481
          %v491 = vadd.f32 %v440, %v468
          %v492 = vadd.f32 %v441, %v470
          %v493 = vadd.f32 %v442, %v472
          %v494 = vadd.f32 %v443, %v474
          %v495 = vadd.f32 %v444, %v476
          %v496 = vadd.f32 %v445, %v478
          %v497 = vadd.f32 %v446, %v480
          %v498 = vadd.f32 %v447, %v482
          %s499 = sadd.s32 %s289, 2
          %s500 = sld [smem:[#allocation6 + %s499]]
          %v501 = vstv %s500
          %v502 = vmul.f32 %v501, %v271
          %v503 = vmul.f32 %v501, %v272
          %v504 = vmul.f32 %v501, %v274
          %v505 = vmul.f32 %v501, %v275
          %v506 = vmul.f32 %v501, %v277
          %v507 = vmul.f32 %v501, %v278
          %v508 = vmul.f32 %v501, %v280
          %v509 = vmul.f32 %v501, %v281
          %518 = vrot.lane.b32.xlu0 %v502, 126
          %v519 = vpop.permute.xlu0 %518
          %520 = vrot.lane.b32.xlu0 %v503, 126
          %v521 = vpop.permute.xlu0 %520
          %522 = vrot.lane.b32.xlu0 %v504, 126
          %v523 = vpop.permute.xlu0 %522
          %524 = vrot.lane.b32.xlu0 %v505, 126
          %v525 = vpop.permute.xlu0 %524
          %526 = vrot.lane.b32.xlu0 %v506, 126
          %v527 = vpop.permute.xlu0 %526
          %528 = vrot.lane.b32.xlu0 %v507, 126
          %v529 = vpop.permute.xlu0 %528
          %530 = vrot.lane.b32.xlu0 %v508, 126
          %v531 = vpop.permute.xlu0 %530
          %532 = vrot.lane.b32.xlu0 %v509, 126
          %v533 = vpop.permute.xlu0 %532
          %v542 = vadd.f32 %v491, %v519
          %v543 = vadd.f32 %v492, %v521
          %v544 = vadd.f32 %v493, %v523
          %v545 = vadd.f32 %v494, %v525
          %v546 = vadd.f32 %v495, %v527
          %v547 = vadd.f32 %v496, %v529
          %v548 = vadd.f32 %v497, %v531
          %v549 = vadd.f32 %v498, %v533
          %s550 = sadd.s32 %s289, 11
          %s551 = sld [smem:[#allocation6 + %s550]]
          %v552 = vstv %s551
          %v553 = vmul.f32 %v552, %v274
          %v554 = vmul.f32 %v552, %v275
          %v555 = vmul.f32 %v552, %v277
          %v556 = vmul.f32 %v552, %v278
          %v557 = vmul.f32 %v552, %v280
          %v558 = vmul.f32 %v552, %v281
          %v559 = vmul.f32 %v552, %v283
          %v560 = vmul.f32 %v552, %v284
          %569 = vrot.lane.b32.xlu0 %v553, 126
          %v570 = vpop.permute.xlu0 %569
          %571 = vrot.lane.b32.xlu0 %v554, 126
          %v572 = vpop.permute.xlu0 %571
          %573 = vrot.lane.b32.xlu0 %v555, 126
          %v574 = vpop.permute.xlu0 %573
          %575 = vrot.lane.b32.xlu0 %v556, 126
          %v576 = vpop.permute.xlu0 %575
          %577 = vrot.lane.b32.xlu0 %v557, 126
          %v578 = vpop.permute.xlu0 %577
          %579 = vrot.lane.b32.xlu0 %v558, 126
          %v580 = vpop.permute.xlu0 %579
          %581 = vrot.lane.b32.xlu0 %v559, 126
          %v582 = vpop.permute.xlu0 %581
          %583 = vrot.lane.b32.xlu0 %v560, 126
          %v584 = vpop.permute.xlu0 %583
          %v593 = vadd.f32 %v542, %v570
          %v594 = vadd.f32 %v543, %v572
          %v595 = vadd.f32 %v544, %v574
          %v596 = vadd.f32 %v545, %v576
          %v597 = vadd.f32 %v546, %v578
          %v598 = vadd.f32 %v547, %v580
          %v599 = vadd.f32 %v548, %v582
          %v600 = vadd.f32 %v549, %v584
          %s601 = sadd.s32 %s289, 20
          %s602 = sld [smem:[#allocation6 + %s601]]
          %v603 = vstv %s602
          %v604 = vmul.f32 %v603, %v277
          %v605 = vmul.f32 %v603, %v278
          %v606 = vmul.f32 %v603, %v280
          %v607 = vmul.f32 %v603, %v281
          %v608 = vmul.f32 %v603, %v283
          %v609 = vmul.f32 %v603, %v284
          %v610 = vmul.f32 %v603, %v286
          %v611 = vmul.f32 %v603, %v287
          %620 = vrot.lane.b32.xlu0 %v604, 126
          %v621 = vpop.permute.xlu0 %620
          %622 = vrot.lane.b32.xlu0 %v605, 126
          %v623 = vpop.permute.xlu0 %622
          %624 = vrot.lane.b32.xlu0 %v606, 126
          %v625 = vpop.permute.xlu0 %624
          %626 = vrot.lane.b32.xlu0 %v607, 126
          %v627 = vpop.permute.xlu0 %626
          %628 = vrot.lane.b32.xlu0 %v608, 126
          %v629 = vpop.permute.xlu0 %628
          %630 = vrot.lane.b32.xlu0 %v609, 126
          %v631 = vpop.permute.xlu0 %630
          %632 = vrot.lane.b32.xlu0 %v610, 126
          %v633 = vpop.permute.xlu0 %632
          %634 = vrot.lane.b32.xlu0 %v611, 126
          %v635 = vpop.permute.xlu0 %634
          %v644 = vadd.f32 %v593, %v621
          %v645 = vadd.f32 %v594, %v623
          %v646 = vadd.f32 %v595, %v625
          %v647 = vadd.f32 %v596, %v627
          %v648 = vadd.f32 %v597, %v629
          %v649 = vadd.f32 %v598, %v631
          %v650 = vadd.f32 %v599, %v633
          %v651 = vadd.f32 %v600, %v635
          %s652 = sadd.s32 %s289, 3
          %s653 = sld [smem:[#allocation6 + %s652]]
          %v654 = vstv %s653
          %v655 = vmul.f32 %v654, %v271
          %v656 = vmul.f32 %v654, %v272
          %v657 = vmul.f32 %v654, %v273
          %v658 = vmul.f32 %v654, %v274
          %v659 = vmul.f32 %v654, %v275
          %v660 = vmul.f32 %v654, %v276
          %v661 = vmul.f32 %v654, %v277
          %v662 = vmul.f32 %v654, %v278
          %v663 = vmul.f32 %v654, %v279
          %v664 = vmul.f32 %v654, %v280
          %v665 = vmul.f32 %v654, %v281
          %v666 = vmul.f32 %v654, %v282
          %vm679 = vcmask 1046528
          %v680 = vrot.slane %v655, 1
          %v681 = vrot.slane %v656, 1
          %v682 = vsel %vm679, %v680, %v681
          %v683 = vrot.slane %v657, 1
          %v684 = vsel %vm679, %v681, %v683
          %v685 = vrot.slane %v658, 1
          %v686 = vrot.slane %v659, 1
          %v687 = vsel %vm679, %v685, %v686
          %v688 = vrot.slane %v660, 1
          %v689 = vsel %vm679, %v686, %v688
          %v690 = vrot.slane %v661, 1
          %v691 = vrot.slane %v662, 1
          %v692 = vsel %vm679, %v690, %v691
          %v693 = vrot.slane %v663, 1
          %v694 = vsel %vm679, %v691, %v693
          %v695 = vrot.slane %v664, 1
          %v696 = vrot.slane %v665, 1
          %v697 = vsel %vm679, %v695, %v696
          %v698 = vrot.slane %v666, 1
          %v699 = vsel %vm679, %v696, %v698
          %v708 = vadd.f32 %v644, %v682
          %v709 = vadd.f32 %v645, %v684
          %v710 = vadd.f32 %v646, %v687
          %v711 = vadd.f32 %v647, %v689
          %v712 = vadd.f32 %v648, %v692
          %v713 = vadd.f32 %v649, %v694
          %v714 = vadd.f32 %v650, %v697
          %v715 = vadd.f32 %v651, %v699
          %s716 = sadd.s32 %s289, 12
          %s717 = sld [smem:[#allocation6 + %s716]]
          %v718 = vstv %s717
          %v719 = vmul.f32 %v718, %v274
          %v720 = vmul.f32 %v718, %v275
          %v721 = vmul.f32 %v718, %v276
          %v722 = vmul.f32 %v718, %v277
          %v723 = vmul.f32 %v718, %v278
          %v724 = vmul.f32 %v718, %v279
          %v725 = vmul.f32 %v718, %v280
          %v726 = vmul.f32 %v718, %v281
          %v727 = vmul.f32 %v718, %v282
          %v728 = vmul.f32 %v718, %v283
          %v729 = vmul.f32 %v718, %v284
          %v730 = vmul.f32 %v718, %v285
          %v743 = vrot.slane %v719, 1
          %v744 = vrot.slane %v720, 1
          %v745 = vsel %vm679, %v743, %v744
          %v746 = vrot.slane %v721, 1
          %v747 = vsel %vm679, %v744, %v746
          %v748 = vrot.slane %v722, 1
          %v749 = vrot.slane %v723, 1
          %v750 = vsel %vm679, %v748, %v749
          %v751 = vrot.slane %v724, 1
          %v752 = vsel %vm679, %v749, %v751
          %v753 = vrot.slane %v725, 1
          %v754 = vrot.slane %v726, 1
          %v755 = vsel %vm679, %v753, %v754
          %v756 = vrot.slane %v727, 1
          %v757 = vsel %vm679, %v754, %v756
          %v758 = vrot.slane %v728, 1
          %v759 = vrot.slane %v729, 1
          %v760 = vsel %vm679, %v758, %v759
          %v761 = vrot.slane %v730, 1
          %v762 = vsel %vm679, %v759, %v761
          %v771 = vadd.f32 %v708, %v745
          %v772 = vadd.f32 %v709, %v747
          %v773 = vadd.f32 %v710, %v750
          %v774 = vadd.f32 %v711, %v752
          %v775 = vadd.f32 %v712, %v755
          %v776 = vadd.f32 %v713, %v757
          %v777 = vadd.f32 %v714, %v760
          %v778 = vadd.f32 %v715, %v762
          %s779 = sadd.s32 %s289, 21
          %s780 = sld [smem:[#allocation6 + %s779]]
          %v781 = vstv %s780
          %v782 = vmul.f32 %v781, %v277
          %v783 = vmul.f32 %v781, %v278
          %v784 = vmul.f32 %v781, %v279
          %v785 = vmul.f32 %v781, %v280
          %v786 = vmul.f32 %v781, %v281
          %v787 = vmul.f32 %v781, %v282
          %v788 = vmul.f32 %v781, %v283
          %v789 = vmul.f32 %v781, %v284
          %v790 = vmul.f32 %v781, %v285
          %v791 = vmul.f32 %v781, %v286
          %v792 = vmul.f32 %v781, %v287
          %v793 = vmul.f32 %v781, %v288
          %v806 = vrot.slane %v782, 1
          %v807 = vrot.slane %v783, 1
          %v808 = vsel %vm679, %v806, %v807
          %v809 = vrot.slane %v784, 1
          %v810 = vsel %vm679, %v807, %v809
          %v811 = vrot.slane %v785, 1
          %v812 = vrot.slane %v786, 1
          %v813 = vsel %vm679, %v811, %v812
          %v814 = vrot.slane %v787, 1
          %v815 = vsel %vm679, %v812, %v814
          %v816 = vrot.slane %v788, 1
          %v817 = vrot.slane %v789, 1
          %v818 = vsel %vm679, %v816, %v817
          %v819 = vrot.slane %v790, 1
          %v820 = vsel %vm679, %v817, %v819
          %v821 = vrot.slane %v791, 1
          %v822 = vrot.slane %v792, 1
          %v823 = vsel %vm679, %v821, %v822
          %v824 = vrot.slane %v793, 1
          %v825 = vsel %vm679, %v822, %v824
          %v834 = vadd.f32 %v771, %v808
          %v835 = vadd.f32 %v772, %v810
          %v836 = vadd.f32 %v773, %v813
          %v837 = vadd.f32 %v774, %v815
          %v838 = vadd.f32 %v775, %v818
          %v839 = vadd.f32 %v776, %v820
          %v840 = vadd.f32 %v777, %v823
          %v841 = vadd.f32 %v778, %v825
          %s842 = sadd.s32 %s289, 4
          %s843 = sld [smem:[#allocation6 + %s842]]
          %v844 = vstv %s843
          %v845 = vmul.f32 %v844, %v271
          %v846 = vmul.f32 %v844, %v272
          %v847 = vmul.f32 %v844, %v273
          %v848 = vmul.f32 %v844, %v274
          %v849 = vmul.f32 %v844, %v275
          %v850 = vmul.f32 %v844, %v276
          %v851 = vmul.f32 %v844, %v277
          %v852 = vmul.f32 %v844, %v278
          %v853 = vmul.f32 %v844, %v279
          %v854 = vmul.f32 %v844, %v280
          %v855 = vmul.f32 %v844, %v281
          %v856 = vmul.f32 %v844, %v282
          %v869 = vrot.slane %v845, 1
          %v870 = vrot.slane %v846, 1
          %v871 = vsel %vm679, %v869, %v870
          %v872 = vrot.slane %v847, 1
          %v873 = vsel %vm679, %v870, %v872
          %v874 = vrot.slane %v848, 1
          %v875 = vrot.slane %v849, 1
          %v876 = vsel %vm679, %v874, %v875
          %v877 = vrot.slane %v850, 1
          %v878 = vsel %vm679, %v875, %v877
          %v879 = vrot.slane %v851, 1
          %v880 = vrot.slane %v852, 1
          %v881 = vsel %vm679, %v879, %v880
          %v882 = vrot.slane %v853, 1
          %v883 = vsel %vm679, %v880, %v882
          %v884 = vrot.slane %v854, 1
          %v885 = vrot.slane %v855, 1
          %v886 = vsel %vm679, %v884, %v885
          %v887 = vrot.slane %v856, 1
          %v888 = vsel %vm679, %v885, %v887
          %889 = vrot.lane.b32.xlu0 %v871, 127
          %v890 = vpop.permute.xlu0 %889
          %891 = vrot.lane.b32.xlu0 %v873, 127
          %v892 = vpop.permute.xlu0 %891
          %893 = vrot.lane.b32.xlu0 %v876, 127
          %v894 = vpop.permute.xlu0 %893
          %895 = vrot.lane.b32.xlu0 %v878, 127
          %v896 = vpop.permute.xlu0 %895
          %897 = vrot.lane.b32.xlu0 %v881, 127
          %v898 = vpop.permute.xlu0 %897
          %899 = vrot.lane.b32.xlu0 %v883, 127
          %v900 = vpop.permute.xlu0 %899
          %901 = vrot.lane.b32.xlu0 %v886, 127
          %v902 = vpop.permute.xlu0 %901
          %903 = vrot.lane.b32.xlu0 %v888, 127
          %v904 = vpop.permute.xlu0 %903
          %v913 = vadd.f32 %v834, %v890
          %v914 = vadd.f32 %v835, %v892
          %v915 = vadd.f32 %v836, %v894
          %v916 = vadd.f32 %v837, %v896
          %v917 = vadd.f32 %v838, %v898
          %v918 = vadd.f32 %v839, %v900
          %v919 = vadd.f32 %v840, %v902
          %v920 = vadd.f32 %v841, %v904
          %s921 = sadd.s32 %s289, 13
          %s922 = sld [smem:[#allocation6 + %s921]]
          %v923 = vstv %s922
          %v924 = vmul.f32 %v923, %v274
          %v925 = vmul.f32 %v923, %v275
          %v926 = vmul.f32 %v923, %v276
          %v927 = vmul.f32 %v923, %v277
          %v928 = vmul.f32 %v923, %v278
          %v929 = vmul.f32 %v923, %v279
          %v930 = vmul.f32 %v923, %v280
          %v931 = vmul.f32 %v923, %v281
          %v932 = vmul.f32 %v923, %v282
          %v933 = vmul.f32 %v923, %v283
          %v934 = vmul.f32 %v923, %v284
          %v935 = vmul.f32 %v923, %v285
          %v948 = vrot.slane %v924, 1
          %v949 = vrot.slane %v925, 1
          %v950 = vsel %vm679, %v948, %v949
          %v951 = vrot.slane %v926, 1
          %v952 = vsel %vm679, %v949, %v951
          %v953 = vrot.slane %v927, 1
          %v954 = vrot.slane %v928, 1
          %v955 = vsel %vm679, %v953, %v954
          %v956 = vrot.slane %v929, 1
          %v957 = vsel %vm679, %v954, %v956
          %v958 = vrot.slane %v930, 1
          %v959 = vrot.slane %v931, 1
          %v960 = vsel %vm679, %v958, %v959
          %v961 = vrot.slane %v932, 1
          %v962 = vsel %vm679, %v959, %v961
          %v963 = vrot.slane %v933, 1
          %v964 = vrot.slane %v934, 1
          %v965 = vsel %vm679, %v963, %v964
          %v966 = vrot.slane %v935, 1
          %v967 = vsel %vm679, %v964, %v966
          %968 = vrot.lane.b32.xlu0 %v950, 127
          %v969 = vpop.permute.xlu0 %968
          %970 = vrot.lane.b32.xlu0 %v952, 127
          %v971 = vpop.permute.xlu0 %970
          %972 = vrot.lane.b32.xlu0 %v955, 127
          %v973 = vpop.permute.xlu0 %972
          %974 = vrot.lane.b32.xlu0 %v957, 127
          %v975 = vpop.permute.xlu0 %974
          %976 = vrot.lane.b32.xlu0 %v960, 127
          %v977 = vpop.permute.xlu0 %976
          %978 = vrot.lane.b32.xlu0 %v962, 127
          %v979 = vpop.permute.xlu0 %978
          %980 = vrot.lane.b32.xlu0 %v965, 127
          %v981 = vpop.permute.xlu0 %980
          %982 = vrot.lane.b32.xlu0 %v967, 127
          %v983 = vpop.permute.xlu0 %982
          %v992 = vadd.f32 %v913, %v969
          %v993 = vadd.f32 %v914, %v971
          %v994 = vadd.f32 %v915, %v973
          %v995 = vadd.f32 %v916, %v975
          %v996 = vadd.f32 %v917, %v977
          %v997 = vadd.f32 %v918, %v979
          %v998 = vadd.f32 %v919, %v981
          %v999 = vadd.f32 %v920, %v983
          %s1000 = sadd.s32 %s289, 22
          %s1001 = sld [smem:[#allocation6 + %s1000]]
          %v1002 = vstv %s1001
          %v1003 = vmul.f32 %v1002, %v277
          %v1004 = vmul.f32 %v1002, %v278
          %v1005 = vmul.f32 %v1002, %v279
          %v1006 = vmul.f32 %v1002, %v280
          %v1007 = vmul.f32 %v1002, %v281
          %v1008 = vmul.f32 %v1002, %v282
          %v1009 = vmul.f32 %v1002, %v283
          %v1010 = vmul.f32 %v1002, %v284
          %v1011 = vmul.f32 %v1002, %v285
          %v1012 = vmul.f32 %v1002, %v286
          %v1013 = vmul.f32 %v1002, %v287
          %v1014 = vmul.f32 %v1002, %v288
          %v1027 = vrot.slane %v1003, 1
          %v1028 = vrot.slane %v1004, 1
          %v1029 = vsel %vm679, %v1027, %v1028
          %v1030 = vrot.slane %v1005, 1
          %v1031 = vsel %vm679, %v1028, %v1030
          %v1032 = vrot.slane %v1006, 1
          %v1033 = vrot.slane %v1007, 1
          %v1034 = vsel %vm679, %v1032, %v1033
          %v1035 = vrot.slane %v1008, 1
          %v1036 = vsel %vm679, %v1033, %v1035
          %v1037 = vrot.slane %v1009, 1
          %v1038 = vrot.slane %v1010, 1
          %v1039 = vsel %vm679, %v1037, %v1038
          %v1040 = vrot.slane %v1011, 1
          %v1041 = vsel %vm679, %v1038, %v1040
          %v1042 = vrot.slane %v1012, 1
          %v1043 = vrot.slane %v1013, 1
          %v1044 = vsel %vm679, %v1042, %v1043
          %v1045 = vrot.slane %v1014, 1
          %v1046 = vsel %vm679, %v1043, %v1045
          %1047 = vrot.lane.b32.xlu0 %v1029, 127
          %v1048 = vpop.permute.xlu0 %1047
          %1049 = vrot.lane.b32.xlu0 %v1031, 127
          %v1050 = vpop.permute.xlu0 %1049
          %1051 = vrot.lane.b32.xlu0 %v1034, 127
          %v1052 = vpop.permute.xlu0 %1051
          %1053 = vrot.lane.b32.xlu0 %v1036, 127
          %v1054 = vpop.permute.xlu0 %1053
          %1055 = vrot.lane.b32.xlu0 %v1039, 127
          %v1056 = vpop.permute.xlu0 %1055
          %1057 = vrot.lane.b32.xlu0 %v1041, 127
          %v1058 = vpop.permute.xlu0 %1057
          %1059 = vrot.lane.b32.xlu0 %v1044, 127
          %v1060 = vpop.permute.xlu0 %1059
          %1061 = vrot.lane.b32.xlu0 %v1046, 127
          %v1062 = vpop.permute.xlu0 %1061
          %v1071 = vadd.f32 %v992, %v1048
          %v1072 = vadd.f32 %v993, %v1050
          %v1073 = vadd.f32 %v994, %v1052
          %v1074 = vadd.f32 %v995, %v1054
          %v1075 = vadd.f32 %v996, %v1056
          %v1076 = vadd.f32 %v997, %v1058
          %v1077 = vadd.f32 %v998, %v1060
          %v1078 = vadd.f32 %v999, %v1062
          %s1079 = sadd.s32 %s289, 5
          %s1080 = sld [smem:[#allocation6 + %s1079]]
          %v1081 = vstv %s1080
          %v1082 = vmul.f32 %v1081, %v271
          %v1083 = vmul.f32 %v1081, %v272
          %v1084 = vmul.f32 %v1081, %v273
          %v1085 = vmul.f32 %v1081, %v274
          %v1086 = vmul.f32 %v1081, %v275
          %v1087 = vmul.f32 %v1081, %v276
          %v1088 = vmul.f32 %v1081, %v277
          %v1089 = vmul.f32 %v1081, %v278
          %v1090 = vmul.f32 %v1081, %v279
          %v1091 = vmul.f32 %v1081, %v280
          %v1092 = vmul.f32 %v1081, %v281
          %v1093 = vmul.f32 %v1081, %v282
          %v1106 = vrot.slane %v1082, 1
          %v1107 = vrot.slane %v1083, 1
          %v1108 = vsel %vm679, %v1106, %v1107
          %v1109 = vrot.slane %v1084, 1
          %v1110 = vsel %vm679, %v1107, %v1109
          %v1111 = vrot.slane %v1085, 1
          %v1112 = vrot.slane %v1086, 1
          %v1113 = vsel %vm679, %v1111, %v1112
          %v1114 = vrot.slane %v1087, 1
          %v1115 = vsel %vm679, %v1112, %v1114
          %v1116 = vrot.slane %v1088, 1
          %v1117 = vrot.slane %v1089, 1
          %v1118 = vsel %vm679, %v1116, %v1117
          %v1119 = vrot.slane %v1090, 1
          %v1120 = vsel %vm679, %v1117, %v1119
          %v1121 = vrot.slane %v1091, 1
          %v1122 = vrot.slane %v1092, 1
          %v1123 = vsel %vm679, %v1121, %v1122
          %v1124 = vrot.slane %v1093, 1
          %v1125 = vsel %vm679, %v1122, %v1124
          %1126 = vrot.lane.b32.xlu0 %v1108, 126
          %v1127 = vpop.permute.xlu0 %1126
          %1128 = vrot.lane.b32.xlu0 %v1110, 126
          %v1129 = vpop.permute.xlu0 %1128
          %1130 = vrot.lane.b32.xlu0 %v1113, 126
          %v1131 = vpop.permute.xlu0 %1130
          %1132 = vrot.lane.b32.xlu0 %v1115, 126
          %v1133 = vpop.permute.xlu0 %1132
          %1134 = vrot.lane.b32.xlu0 %v1118, 126
          %v1135 = vpop.permute.xlu0 %1134
          %1136 = vrot.lane.b32.xlu0 %v1120, 126
          %v1137 = vpop.permute.xlu0 %1136
          %1138 = vrot.lane.b32.xlu0 %v1123, 126
          %v1139 = vpop.permute.xlu0 %1138
          %1140 = vrot.lane.b32.xlu0 %v1125, 126
          %v1141 = vpop.permute.xlu0 %1140
          %v1150 = vadd.f32 %v1071, %v1127
          %v1151 = vadd.f32 %v1072, %v1129
          %v1152 = vadd.f32 %v1073, %v1131
          %v1153 = vadd.f32 %v1074, %v1133
          %v1154 = vadd.f32 %v1075, %v1135
          %v1155 = vadd.f32 %v1076, %v1137
          %v1156 = vadd.f32 %v1077, %v1139
          %v1157 = vadd.f32 %v1078, %v1141
          %s1158 = sadd.s32 %s289, 14
          %s1159 = sld [smem:[#allocation6 + %s1158]]
          %v1160 = vstv %s1159
          %v1161 = vmul.f32 %v1160, %v274
          %v1162 = vmul.f32 %v1160, %v275
          %v1163 = vmul.f32 %v1160, %v276
          %v1164 = vmul.f32 %v1160, %v277
          %v1165 = vmul.f32 %v1160, %v278
          %v1166 = vmul.f32 %v1160, %v279
          %v1167 = vmul.f32 %v1160, %v280
          %v1168 = vmul.f32 %v1160, %v281
          %v1169 = vmul.f32 %v1160, %v282
          %v1170 = vmul.f32 %v1160, %v283
          %v1171 = vmul.f32 %v1160, %v284
          %v1172 = vmul.f32 %v1160, %v285
          %v1185 = vrot.slane %v1161, 1
          %v1186 = vrot.slane %v1162, 1
          %v1187 = vsel %vm679, %v1185, %v1186
          %v1188 = vrot.slane %v1163, 1
          %v1189 = vsel %vm679, %v1186, %v1188
          %v1190 = vrot.slane %v1164, 1
          %v1191 = vrot.slane %v1165, 1
          %v1192 = vsel %vm679, %v1190, %v1191
          %v1193 = vrot.slane %v1166, 1
          %v1194 = vsel %vm679, %v1191, %v1193
          %v1195 = vrot.slane %v1167, 1
          %v1196 = vrot.slane %v1168, 1
          %v1197 = vsel %vm679, %v1195, %v1196
          %v1198 = vrot.slane %v1169, 1
          %v1199 = vsel %vm679, %v1196, %v1198
          %v1200 = vrot.slane %v1170, 1
          %v1201 = vrot.slane %v1171, 1
          %v1202 = vsel %vm679, %v1200, %v1201
          %v1203 = vrot.slane %v1172, 1
          %v1204 = vsel %vm679, %v1201, %v1203
          %1205 = vrot.lane.b32.xlu0 %v1187, 126
          %v1206 = vpop.permute.xlu0 %1205
          %1207 = vrot.lane.b32.xlu0 %v1189, 126
          %v1208 = vpop.permute.xlu0 %1207
          %1209 = vrot.lane.b32.xlu0 %v1192, 126
          %v1210 = vpop.permute.xlu0 %1209
          %1211 = vrot.lane.b32.xlu0 %v1194, 126
          %v1212 = vpop.permute.xlu0 %1211
          %1213 = vrot.lane.b32.xlu0 %v1197, 126
          %v1214 = vpop.permute.xlu0 %1213
          %1215 = vrot.lane.b32.xlu0 %v1199, 126
          %v1216 = vpop.permute.xlu0 %1215
          %1217 = vrot.lane.b32.xlu0 %v1202, 126
          %v1218 = vpop.permute.xlu0 %1217
          %1219 = vrot.lane.b32.xlu0 %v1204, 126
          %v1220 = vpop.permute.xlu0 %1219
          %v1229 = vadd.f32 %v1150, %v1206
          %v1230 = vadd.f32 %v1151, %v1208
          %v1231 = vadd.f32 %v1152, %v1210
          %v1232 = vadd.f32 %v1153, %v1212
          %v1233 = vadd.f32 %v1154, %v1214
          %v1234 = vadd.f32 %v1155, %v1216
          %v1235 = vadd.f32 %v1156, %v1218
          %v1236 = vadd.f32 %v1157, %v1220
          %s1237 = sadd.s32 %s289, 23
          %s1238 = sld [smem:[#allocation6 + %s1237]]
          %v1239 = vstv %s1238
          %v1240 = vmul.f32 %v1239, %v277
          %v1241 = vmul.f32 %v1239, %v278
          %v1242 = vmul.f32 %v1239, %v279
          %v1243 = vmul.f32 %v1239, %v280
          %v1244 = vmul.f32 %v1239, %v281
          %v1245 = vmul.f32 %v1239, %v282
          %v1246 = vmul.f32 %v1239, %v283
          %v1247 = vmul.f32 %v1239, %v284
          %v1248 = vmul.f32 %v1239, %v285
          %v1249 = vmul.f32 %v1239, %v286
          %v1250 = vmul.f32 %v1239, %v287
          %v1251 = vmul.f32 %v1239, %v288
          %v1264 = vrot.slane %v1240, 1
          %v1265 = vrot.slane %v1241, 1
          %v1266 = vsel %vm679, %v1264, %v1265
          %v1267 = vrot.slane %v1242, 1
          %v1268 = vsel %vm679, %v1265, %v1267
          %v1269 = vrot.slane %v1243, 1
          %v1270 = vrot.slane %v1244, 1
          %v1271 = vsel %vm679, %v1269, %v1270
          %v1272 = vrot.slane %v1245, 1
          %v1273 = vsel %vm679, %v1270, %v1272
          %v1274 = vrot.slane %v1246, 1
          %v1275 = vrot.slane %v1247, 1
          %v1276 = vsel %vm679, %v1274, %v1275
          %v1277 = vrot.slane %v1248, 1
          %v1278 = vsel %vm679, %v1275, %v1277
          %v1279 = vrot.slane %v1249, 1
          %v1280 = vrot.slane %v1250, 1
          %v1281 = vsel %vm679, %v1279, %v1280
          %v1282 = vrot.slane %v1251, 1
          %v1283 = vsel %vm679, %v1280, %v1282
          %1284 = vrot.lane.b32.xlu0 %v1266, 126
          %v1285 = vpop.permute.xlu0 %1284
          %1286 = vrot.lane.b32.xlu0 %v1268, 126
          %v1287 = vpop.permute.xlu0 %1286
          %1288 = vrot.lane.b32.xlu0 %v1271, 126
          %v1289 = vpop.permute.xlu0 %1288
          %1290 = vrot.lane.b32.xlu0 %v1273, 126
          %v1291 = vpop.permute.xlu0 %1290
          %1292 = vrot.lane.b32.xlu0 %v1276, 126
          %v1293 = vpop.permute.xlu0 %1292
          %1294 = vrot.lane.b32.xlu0 %v1278, 126
          %v1295 = vpop.permute.xlu0 %1294
          %1296 = vrot.lane.b32.xlu0 %v1281, 126
          %v1297 = vpop.permute.xlu0 %1296
          %1298 = vrot.lane.b32.xlu0 %v1283, 126
          %v1299 = vpop.permute.xlu0 %1298
          %v1308 = vadd.f32 %v1229, %v1285
          %v1309 = vadd.f32 %v1230, %v1287
          %v1310 = vadd.f32 %v1231, %v1289
          %v1311 = vadd.f32 %v1232, %v1291
          %v1312 = vadd.f32 %v1233, %v1293
          %v1313 = vadd.f32 %v1234, %v1295
          %v1314 = vadd.f32 %v1235, %v1297
          %v1315 = vadd.f32 %v1236, %v1299
          %s1316 = sadd.s32 %s289, 6
          %s1317 = sld [smem:[#allocation6 + %s1316]]
          %v1318 = vstv %s1317
          %v1319 = vmul.f32 %v1318, %v271
          %v1320 = vmul.f32 %v1318, %v272
          %v1321 = vmul.f32 %v1318, %v273
          %v1322 = vmul.f32 %v1318, %v274
          %v1323 = vmul.f32 %v1318, %v275
          %v1324 = vmul.f32 %v1318, %v276
          %v1325 = vmul.f32 %v1318, %v277
          %v1326 = vmul.f32 %v1318, %v278
          %v1327 = vmul.f32 %v1318, %v279
          %v1328 = vmul.f32 %v1318, %v280
          %v1329 = vmul.f32 %v1318, %v281
          %v1330 = vmul.f32 %v1318, %v282
          %vm1343 = vcmask 1045504
          %v1344 = vrot.slane %v1319, 2
          %v1345 = vrot.slane %v1320, 2
          %v1346 = vsel %vm1343, %v1344, %v1345
          %v1347 = vrot.slane %v1321, 2
          %v1348 = vsel %vm1343, %v1345, %v1347
          %v1349 = vrot.slane %v1322, 2
          %v1350 = vrot.slane %v1323, 2
          %v1351 = vsel %vm1343, %v1349, %v1350
          %v1352 = vrot.slane %v1324, 2
          %v1353 = vsel %vm1343, %v1350, %v1352
          %v1354 = vrot.slane %v1325, 2
          %v1355 = vrot.slane %v1326, 2
          %v1356 = vsel %vm1343, %v1354, %v1355
          %v1357 = vrot.slane %v1327, 2
          %v1358 = vsel %vm1343, %v1355, %v1357
          %v1359 = vrot.slane %v1328, 2
          %v1360 = vrot.slane %v1329, 2
          %v1361 = vsel %vm1343, %v1359, %v1360
          %v1362 = vrot.slane %v1330, 2
          %v1363 = vsel %vm1343, %v1360, %v1362
          %v1372 = vadd.f32 %v1308, %v1346
          %v1373 = vadd.f32 %v1309, %v1348
          %v1374 = vadd.f32 %v1310, %v1351
          %v1375 = vadd.f32 %v1311, %v1353
          %v1376 = vadd.f32 %v1312, %v1356
          %v1377 = vadd.f32 %v1313, %v1358
          %v1378 = vadd.f32 %v1314, %v1361
          %v1379 = vadd.f32 %v1315, %v1363
          %s1380 = sadd.s32 %s289, 15
          %s1381 = sld [smem:[#allocation6 + %s1380]]
          %v1382 = vstv %s1381
          %v1383 = vmul.f32 %v1382, %v274
          %v1384 = vmul.f32 %v1382, %v275
          %v1385 = vmul.f32 %v1382, %v276
          %v1386 = vmul.f32 %v1382, %v277
          %v1387 = vmul.f32 %v1382, %v278
          %v1388 = vmul.f32 %v1382, %v279
          %v1389 = vmul.f32 %v1382, %v280
          %v1390 = vmul.f32 %v1382, %v281
          %v1391 = vmul.f32 %v1382, %v282
          %v1392 = vmul.f32 %v1382, %v283
          %v1393 = vmul.f32 %v1382, %v284
          %v1394 = vmul.f32 %v1382, %v285
          %v1407 = vrot.slane %v1383, 2
          %v1408 = vrot.slane %v1384, 2
          %v1409 = vsel %vm1343, %v1407, %v1408
          %v1410 = vrot.slane %v1385, 2
          %v1411 = vsel %vm1343, %v1408, %v1410
          %v1412 = vrot.slane %v1386, 2
          %v1413 = vrot.slane %v1387, 2
          %v1414 = vsel %vm1343, %v1412, %v1413
          %v1415 = vrot.slane %v1388, 2
          %v1416 = vsel %vm1343, %v1413, %v1415
          %v1417 = vrot.slane %v1389, 2
          %v1418 = vrot.slane %v1390, 2
          %v1419 = vsel %vm1343, %v1417, %v1418
          %v1420 = vrot.slane %v1391, 2
          %v1421 = vsel %vm1343, %v1418, %v1420
          %v1422 = vrot.slane %v1392, 2
          %v1423 = vrot.slane %v1393, 2
          %v1424 = vsel %vm1343, %v1422, %v1423
          %v1425 = vrot.slane %v1394, 2
          %v1426 = vsel %vm1343, %v1423, %v1425
          %v1435 = vadd.f32 %v1372, %v1409
          %v1436 = vadd.f32 %v1373, %v1411
          %v1437 = vadd.f32 %v1374, %v1414
          %v1438 = vadd.f32 %v1375, %v1416
          %v1439 = vadd.f32 %v1376, %v1419
          %v1440 = vadd.f32 %v1377, %v1421
          %v1441 = vadd.f32 %v1378, %v1424
          %v1442 = vadd.f32 %v1379, %v1426
          %s1443 = sadd.s32 %s289, 24
          %s1444 = sld [smem:[#allocation6 + %s1443]]
          %v1445 = vstv %s1444
          %v1446 = vmul.f32 %v1445, %v277
          %v1447 = vmul.f32 %v1445, %v278
          %v1448 = vmul.f32 %v1445, %v279
          %v1449 = vmul.f32 %v1445, %v280
          %v1450 = vmul.f32 %v1445, %v281
          %v1451 = vmul.f32 %v1445, %v282
          %v1452 = vmul.f32 %v1445, %v283
          %v1453 = vmul.f32 %v1445, %v284
          %v1454 = vmul.f32 %v1445, %v285
          %v1455 = vmul.f32 %v1445, %v286
          %v1456 = vmul.f32 %v1445, %v287
          %v1457 = vmul.f32 %v1445, %v288
          %v1470 = vrot.slane %v1446, 2
          %v1471 = vrot.slane %v1447, 2
          %v1472 = vsel %vm1343, %v1470, %v1471
          %v1473 = vrot.slane %v1448, 2
          %v1474 = vsel %vm1343, %v1471, %v1473
          %v1475 = vrot.slane %v1449, 2
          %v1476 = vrot.slane %v1450, 2
          %v1477 = vsel %vm1343, %v1475, %v1476
          %v1478 = vrot.slane %v1451, 2
          %v1479 = vsel %vm1343, %v1476, %v1478
          %v1480 = vrot.slane %v1452, 2
          %v1481 = vrot.slane %v1453, 2
          %v1482 = vsel %vm1343, %v1480, %v1481
          %v1483 = vrot.slane %v1454, 2
          %v1484 = vsel %vm1343, %v1481, %v1483
          %v1485 = vrot.slane %v1455, 2
          %v1486 = vrot.slane %v1456, 2
          %v1487 = vsel %vm1343, %v1485, %v1486
          %v1488 = vrot.slane %v1457, 2
          %v1489 = vsel %vm1343, %v1486, %v1488
          %v1498 = vadd.f32 %v1435, %v1472
          %v1499 = vadd.f32 %v1436, %v1474
          %v1500 = vadd.f32 %v1437, %v1477
          %v1501 = vadd.f32 %v1438, %v1479
          %v1502 = vadd.f32 %v1439, %v1482
          %v1503 = vadd.f32 %v1440, %v1484
          %v1504 = vadd.f32 %v1441, %v1487
          %v1505 = vadd.f32 %v1442, %v1489
          %s1506 = sadd.s32 %s289, 7
          %s1507 = sld [smem:[#allocation6 + %s1506]]
          %v1508 = vstv %s1507
          %v1509 = vmul.f32 %v1508, %v271
          %v1510 = vmul.f32 %v1508, %v272
          %v1511 = vmul.f32 %v1508, %v273
          %v1512 = vmul.f32 %v1508, %v274
          %v1513 = vmul.f32 %v1508, %v275
          %v1514 = vmul.f32 %v1508, %v276
          %v1515 = vmul.f32 %v1508, %v277
          %v1516 = vmul.f32 %v1508, %v278
          %v1517 = vmul.f32 %v1508, %v279
          %v1518 = vmul.f32 %v1508, %v280
          %v1519 = vmul.f32 %v1508, %v281
          %v1520 = vmul.f32 %v1508, %v282
          %v1533 = vrot.slane %v1509, 2
          %v1534 = vrot.slane %v1510, 2
          %v1535 = vsel %vm1343, %v1533, %v1534
          %v1536 = vrot.slane %v1511, 2
          %v1537 = vsel %vm1343, %v1534, %v1536
          %v1538 = vrot.slane %v1512, 2
          %v1539 = vrot.slane %v1513, 2
          %v1540 = vsel %vm1343, %v1538, %v1539
          %v1541 = vrot.slane %v1514, 2
          %v1542 = vsel %vm1343, %v1539, %v1541
          %v1543 = vrot.slane %v1515, 2
          %v1544 = vrot.slane %v1516, 2
          %v1545 = vsel %vm1343, %v1543, %v1544
          %v1546 = vrot.slane %v1517, 2
          %v1547 = vsel %vm1343, %v1544, %v1546
          %v1548 = vrot.slane %v1518, 2
          %v1549 = vrot.slane %v1519, 2
          %v1550 = vsel %vm1343, %v1548, %v1549
          %v1551 = vrot.slane %v1520, 2
          %v1552 = vsel %vm1343, %v1549, %v1551
          %1553 = vrot.lane.b32.xlu0 %v1535, 127
          %v1554 = vpop.permute.xlu0 %1553
          %1555 = vrot.lane.b32.xlu0 %v1537, 127
          %v1556 = vpop.permute.xlu0 %1555
          %1557 = vrot.lane.b32.xlu0 %v1540, 127
          %v1558 = vpop.permute.xlu0 %1557
          %1559 = vrot.lane.b32.xlu0 %v1542, 127
          %v1560 = vpop.permute.xlu0 %1559
          %1561 = vrot.lane.b32.xlu0 %v1545, 127
          %v1562 = vpop.permute.xlu0 %1561
          %1563 = vrot.lane.b32.xlu0 %v1547, 127
          %v1564 = vpop.permute.xlu0 %1563
          %1565 = vrot.lane.b32.xlu0 %v1550, 127
          %v1566 = vpop.permute.xlu0 %1565
          %1567 = vrot.lane.b32.xlu0 %v1552, 127
          %v1568 = vpop.permute.xlu0 %1567
          %v1577 = vadd.f32 %v1498, %v1554
          %v1578 = vadd.f32 %v1499, %v1556
          %v1579 = vadd.f32 %v1500, %v1558
          %v1580 = vadd.f32 %v1501, %v1560
          %v1581 = vadd.f32 %v1502, %v1562
          %v1582 = vadd.f32 %v1503, %v1564
          %v1583 = vadd.f32 %v1504, %v1566
          %v1584 = vadd.f32 %v1505, %v1568
          %s1585 = sadd.s32 %s289, 16
          %s1586 = sld [smem:[#allocation6 + %s1585]]
          %v1587 = vstv %s1586
          %v1588 = vmul.f32 %v1587, %v274
          %v1589 = vmul.f32 %v1587, %v275
          %v1590 = vmul.f32 %v1587, %v276
          %v1591 = vmul.f32 %v1587, %v277
          %v1592 = vmul.f32 %v1587, %v278
          %v1593 = vmul.f32 %v1587, %v279
          %v1594 = vmul.f32 %v1587, %v280
          %v1595 = vmul.f32 %v1587, %v281
          %v1596 = vmul.f32 %v1587, %v282
          %v1597 = vmul.f32 %v1587, %v283
          %v1598 = vmul.f32 %v1587, %v284
          %v1599 = vmul.f32 %v1587, %v285
          %v1612 = vrot.slane %v1588, 2
          %v1613 = vrot.slane %v1589, 2
          %v1614 = vsel %vm1343, %v1612, %v1613
          %v1615 = vrot.slane %v1590, 2
          %v1616 = vsel %vm1343, %v1613, %v1615
          %v1617 = vrot.slane %v1591, 2
          %v1618 = vrot.slane %v1592, 2
          %v1619 = vsel %vm1343, %v1617, %v1618
          %v1620 = vrot.slane %v1593, 2
          %v1621 = vsel %vm1343, %v1618, %v1620
          %v1622 = vrot.slane %v1594, 2
          %v1623 = vrot.slane %v1595, 2
          %v1624 = vsel %vm1343, %v1622, %v1623
          %v1625 = vrot.slane %v1596, 2
          %v1626 = vsel %vm1343, %v1623, %v1625
          %v1627 = vrot.slane %v1597, 2
          %v1628 = vrot.slane %v1598, 2
          %v1629 = vsel %vm1343, %v1627, %v1628
          %v1630 = vrot.slane %v1599, 2
          %v1631 = vsel %vm1343, %v1628, %v1630
          %1632 = vrot.lane.b32.xlu0 %v1614, 127
          %v1633 = vpop.permute.xlu0 %1632
          %1634 = vrot.lane.b32.xlu0 %v1616, 127
          %v1635 = vpop.permute.xlu0 %1634
          %1636 = vrot.lane.b32.xlu0 %v1619, 127
          %v1637 = vpop.permute.xlu0 %1636
          %1638 = vrot.lane.b32.xlu0 %v1621, 127
          %v1639 = vpop.permute.xlu0 %1638
          %1640 = vrot.lane.b32.xlu0 %v1624, 127
          %v1641 = vpop.permute.xlu0 %1640
          %1642 = vrot.lane.b32.xlu0 %v1626, 127
          %v1643 = vpop.permute.xlu0 %1642
          %1644 = vrot.lane.b32.xlu0 %v1629, 127
          %v1645 = vpop.permute.xlu0 %1644
          %1646 = vrot.lane.b32.xlu0 %v1631, 127
          %v1647 = vpop.permute.xlu0 %1646
          %v1656 = vadd.f32 %v1577, %v1633
          %v1657 = vadd.f32 %v1578, %v1635
          %v1658 = vadd.f32 %v1579, %v1637
          %v1659 = vadd.f32 %v1580, %v1639
          %v1660 = vadd.f32 %v1581, %v1641
          %v1661 = vadd.f32 %v1582, %v1643
          %v1662 = vadd.f32 %v1583, %v1645
          %v1663 = vadd.f32 %v1584, %v1647
          %s1664 = sadd.s32 %s289, 25
          %s1665 = sld [smem:[#allocation6 + %s1664]]
          %v1666 = vstv %s1665
          %v1667 = vmul.f32 %v1666, %v277
          %v1668 = vmul.f32 %v1666, %v278
          %v1669 = vmul.f32 %v1666, %v279
          %v1670 = vmul.f32 %v1666, %v280
          %v1671 = vmul.f32 %v1666, %v281
          %v1672 = vmul.f32 %v1666, %v282
          %v1673 = vmul.f32 %v1666, %v283
          %v1674 = vmul.f32 %v1666, %v284
          %v1675 = vmul.f32 %v1666, %v285
          %v1676 = vmul.f32 %v1666, %v286
          %v1677 = vmul.f32 %v1666, %v287
          %v1678 = vmul.f32 %v1666, %v288
          %v1691 = vrot.slane %v1667, 2
          %v1692 = vrot.slane %v1668, 2
          %v1693 = vsel %vm1343, %v1691, %v1692
          %v1694 = vrot.slane %v1669, 2
          %v1695 = vsel %vm1343, %v1692, %v1694
          %v1696 = vrot.slane %v1670, 2
          %v1697 = vrot.slane %v1671, 2
          %v1698 = vsel %vm1343, %v1696, %v1697
          %v1699 = vrot.slane %v1672, 2
          %v1700 = vsel %vm1343, %v1697, %v1699
          %v1701 = vrot.slane %v1673, 2
          %v1702 = vrot.slane %v1674, 2
          %v1703 = vsel %vm1343, %v1701, %v1702
          %v1704 = vrot.slane %v1675, 2
          %v1705 = vsel %vm1343, %v1702, %v1704
          %v1706 = vrot.slane %v1676, 2
          %v1707 = vrot.slane %v1677, 2
          %v1708 = vsel %vm1343, %v1706, %v1707
          %v1709 = vrot.slane %v1678, 2
          %v1710 = vsel %vm1343, %v1707, %v1709
          %1711 = vrot.lane.b32.xlu0 %v1693, 127
          %v1712 = vpop.permute.xlu0 %1711
          %1713 = vrot.lane.b32.xlu0 %v1695, 127
          %v1714 = vpop.permute.xlu0 %1713
          %1715 = vrot.lane.b32.xlu0 %v1698, 127
          %v1716 = vpop.permute.xlu0 %1715
          %1717 = vrot.lane.b32.xlu0 %v1700, 127
          %v1718 = vpop.permute.xlu0 %1717
          %1719 = vrot.lane.b32.xlu0 %v1703, 127
          %v1720 = vpop.permute.xlu0 %1719
          %1721 = vrot.lane.b32.xlu0 %v1705, 127
          %v1722 = vpop.permute.xlu0 %1721
          %1723 = vrot.lane.b32.xlu0 %v1708, 127
          %v1724 = vpop.permute.xlu0 %1723
          %1725 = vrot.lane.b32.xlu0 %v1710, 127
          %v1726 = vpop.permute.xlu0 %1725
          %v1735 = vadd.f32 %v1656, %v1712
          %v1736 = vadd.f32 %v1657, %v1714
          %v1737 = vadd.f32 %v1658, %v1716
          %v1738 = vadd.f32 %v1659, %v1718
          %v1739 = vadd.f32 %v1660, %v1720
          %v1740 = vadd.f32 %v1661, %v1722
          %v1741 = vadd.f32 %v1662, %v1724
          %v1742 = vadd.f32 %v1663, %v1726
          %s1743 = sadd.s32 %s289, 8
          %s1744 = sld [smem:[#allocation6 + %s1743]]
          %v1745 = vstv %s1744
          %v1746 = vmul.f32 %v1745, %v271
          %v1747 = vmul.f32 %v1745, %v272
          %v1748 = vmul.f32 %v1745, %v273
          %v1749 = vmul.f32 %v1745, %v274
          %v1750 = vmul.f32 %v1745, %v275
          %v1751 = vmul.f32 %v1745, %v276
          %v1752 = vmul.f32 %v1745, %v277
          %v1753 = vmul.f32 %v1745, %v278
          %v1754 = vmul.f32 %v1745, %v279
          %v1755 = vmul.f32 %v1745, %v280
          %v1756 = vmul.f32 %v1745, %v281
          %v1757 = vmul.f32 %v1745, %v282
          %v1770 = vrot.slane %v1746, 2
          %v1771 = vrot.slane %v1747, 2
          %v1772 = vsel %vm1343, %v1770, %v1771
          %v1773 = vrot.slane %v1748, 2
          %v1774 = vsel %vm1343, %v1771, %v1773
          %v1775 = vrot.slane %v1749, 2
          %v1776 = vrot.slane %v1750, 2
          %v1777 = vsel %vm1343, %v1775, %v1776
          %v1778 = vrot.slane %v1751, 2
          %v1779 = vsel %vm1343, %v1776, %v1778
          %v1780 = vrot.slane %v1752, 2
          %v1781 = vrot.slane %v1753, 2
          %v1782 = vsel %vm1343, %v1780, %v1781
          %v1783 = vrot.slane %v1754, 2
          %v1784 = vsel %vm1343, %v1781, %v1783
          %v1785 = vrot.slane %v1755, 2
          %v1786 = vrot.slane %v1756, 2
          %v1787 = vsel %vm1343, %v1785, %v1786
          %v1788 = vrot.slane %v1757, 2
          %v1789 = vsel %vm1343, %v1786, %v1788
          %1790 = vrot.lane.b32.xlu0 %v1772, 126
          %v1791 = vpop.permute.xlu0 %1790
          %1792 = vrot.lane.b32.xlu0 %v1774, 126
          %v1793 = vpop.permute.xlu0 %1792
          %1794 = vrot.lane.b32.xlu0 %v1777, 126
          %v1795 = vpop.permute.xlu0 %1794
          %1796 = vrot.lane.b32.xlu0 %v1779, 126
          %v1797 = vpop.permute.xlu0 %1796
          %1798 = vrot.lane.b32.xlu0 %v1782, 126
          %v1799 = vpop.permute.xlu0 %1798
          %1800 = vrot.lane.b32.xlu0 %v1784, 126
          %v1801 = vpop.permute.xlu0 %1800
          %1802 = vrot.lane.b32.xlu0 %v1787, 126
          %v1803 = vpop.permute.xlu0 %1802
          %1804 = vrot.lane.b32.xlu0 %v1789, 126
          %v1805 = vpop.permute.xlu0 %1804
          %v1814 = vadd.f32 %v1735, %v1791
          %v1815 = vadd.f32 %v1736, %v1793
          %v1816 = vadd.f32 %v1737, %v1795
          %v1817 = vadd.f32 %v1738, %v1797
          %v1818 = vadd.f32 %v1739, %v1799
          %v1819 = vadd.f32 %v1740, %v1801
          %v1820 = vadd.f32 %v1741, %v1803
          %v1821 = vadd.f32 %v1742, %v1805
          %s1822 = sadd.s32 %s289, 17
          %s1823 = sld [smem:[#allocation6 + %s1822]]
          %v1824 = vstv %s1823
          %v1825 = vmul.f32 %v1824, %v274
          %v1826 = vmul.f32 %v1824, %v275
          %v1827 = vmul.f32 %v1824, %v276
          %v1828 = vmul.f32 %v1824, %v277
          %v1829 = vmul.f32 %v1824, %v278
          %v1830 = vmul.f32 %v1824, %v279
          %v1831 = vmul.f32 %v1824, %v280
          %v1832 = vmul.f32 %v1824, %v281
          %v1833 = vmul.f32 %v1824, %v282
          %v1834 = vmul.f32 %v1824, %v283
          %v1835 = vmul.f32 %v1824, %v284
          %v1836 = vmul.f32 %v1824, %v285
          %v1849 = vrot.slane %v1825, 2
          %v1850 = vrot.slane %v1826, 2
          %v1851 = vsel %vm1343, %v1849, %v1850
          %v1852 = vrot.slane %v1827, 2
          %v1853 = vsel %vm1343, %v1850, %v1852
          %v1854 = vrot.slane %v1828, 2
          %v1855 = vrot.slane %v1829, 2
          %v1856 = vsel %vm1343, %v1854, %v1855
          %v1857 = vrot.slane %v1830, 2
          %v1858 = vsel %vm1343, %v1855, %v1857
          %v1859 = vrot.slane %v1831, 2
          %v1860 = vrot.slane %v1832, 2
          %v1861 = vsel %vm1343, %v1859, %v1860
          %v1862 = vrot.slane %v1833, 2
          %v1863 = vsel %vm1343, %v1860, %v1862
          %v1864 = vrot.slane %v1834, 2
          %v1865 = vrot.slane %v1835, 2
          %v1866 = vsel %vm1343, %v1864, %v1865
          %v1867 = vrot.slane %v1836, 2
          %v1868 = vsel %vm1343, %v1865, %v1867
          %1869 = vrot.lane.b32.xlu0 %v1851, 126
          %v1870 = vpop.permute.xlu0 %1869
          %1871 = vrot.lane.b32.xlu0 %v1853, 126
          %v1872 = vpop.permute.xlu0 %1871
          %1873 = vrot.lane.b32.xlu0 %v1856, 126
          %v1874 = vpop.permute.xlu0 %1873
          %1875 = vrot.lane.b32.xlu0 %v1858, 126
          %v1876 = vpop.permute.xlu0 %1875
          %1877 = vrot.lane.b32.xlu0 %v1861, 126
          %v1878 = vpop.permute.xlu0 %1877
          %1879 = vrot.lane.b32.xlu0 %v1863, 126
          %v1880 = vpop.permute.xlu0 %1879
          %1881 = vrot.lane.b32.xlu0 %v1866, 126
          %v1882 = vpop.permute.xlu0 %1881
          %1883 = vrot.lane.b32.xlu0 %v1868, 126
          %v1884 = vpop.permute.xlu0 %1883
          %v1893 = vadd.f32 %v1814, %v1870
          %v1894 = vadd.f32 %v1815, %v1872
          %v1895 = vadd.f32 %v1816, %v1874
          %v1896 = vadd.f32 %v1817, %v1876
          %v1897 = vadd.f32 %v1818, %v1878
          %v1898 = vadd.f32 %v1819, %v1880
          %v1899 = vadd.f32 %v1820, %v1882
          %v1900 = vadd.f32 %v1821, %v1884
          %s1901 = sadd.s32 %s289, 26
          %s1902 = sld [smem:[#allocation6 + %s1901]]
          %v1903 = vstv %s1902
          %v1904 = vmul.f32 %v1903, %v277
          %v1905 = vmul.f32 %v1903, %v278
          %v1906 = vmul.f32 %v1903, %v279
          %v1907 = vmul.f32 %v1903, %v280
          %v1908 = vmul.f32 %v1903, %v281
          %v1909 = vmul.f32 %v1903, %v282
          %v1910 = vmul.f32 %v1903, %v283
          %v1911 = vmul.f32 %v1903, %v284
          %v1912 = vmul.f32 %v1903, %v285
          %v1913 = vmul.f32 %v1903, %v286
          %v1914 = vmul.f32 %v1903, %v287
          %v1915 = vmul.f32 %v1903, %v288
          %v1928 = vrot.slane %v1904, 2
          %v1929 = vrot.slane %v1905, 2
          %v1930 = vsel %vm1343, %v1928, %v1929
          %v1931 = vrot.slane %v1906, 2
          %v1932 = vsel %vm1343, %v1929, %v1931
          %v1933 = vrot.slane %v1907, 2
          %v1934 = vrot.slane %v1908, 2
          %v1935 = vsel %vm1343, %v1933, %v1934
          %v1936 = vrot.slane %v1909, 2
          %v1937 = vsel %vm1343, %v1934, %v1936
          %v1938 = vrot.slane %v1910, 2
          %v1939 = vrot.slane %v1911, 2
          %v1940 = vsel %vm1343, %v1938, %v1939
          %v1941 = vrot.slane %v1912, 2
          %v1942 = vsel %vm1343, %v1939, %v1941
          %v1943 = vrot.slane %v1913, 2
          %v1944 = vrot.slane %v1914, 2
          %v1945 = vsel %vm1343, %v1943, %v1944
          %v1946 = vrot.slane %v1915, 2
          %v1947 = vsel %vm1343, %v1944, %v1946
          %1948 = vrot.lane.b32.xlu0 %v1930, 126
          %v1949 = vpop.permute.xlu0 %1948
          %1950 = vrot.lane.b32.xlu0 %v1932, 126
          %v1951 = vpop.permute.xlu0 %1950
          %1952 = vrot.lane.b32.xlu0 %v1935, 126
          %v1953 = vpop.permute.xlu0 %1952
          %1954 = vrot.lane.b32.xlu0 %v1937, 126
          %v1955 = vpop.permute.xlu0 %1954
          %1956 = vrot.lane.b32.xlu0 %v1940, 126
          %v1957 = vpop.permute.xlu0 %1956
          %1958 = vrot.lane.b32.xlu0 %v1942, 126
          %v1959 = vpop.permute.xlu0 %1958
          %1960 = vrot.lane.b32.xlu0 %v1945, 126
          %v1961 = vpop.permute.xlu0 %1960
          %1962 = vrot.lane.b32.xlu0 %v1947, 126
          %v1963 = vpop.permute.xlu0 %1962
          %v1972 = vadd.f32 %v1893, %v1949
          %v1973 = vadd.f32 %v1894, %v1951
          %v1974 = vadd.f32 %v1895, %v1953
          %v1975 = vadd.f32 %v1896, %v1955
          %v1976 = vadd.f32 %v1897, %v1957
          %v1977 = vadd.f32 %v1898, %v1959
          %v1978 = vadd.f32 %v1899, %v1961
          %v1979 = vadd.f32 %v1900, %v1963
          %v1980 = vld [vmem:[%s235] sm:$0xff]
          %v1981 = vld [vmem:[%s235 + $0x8] sm:$0xff]
          %v1982 = vld [vmem:[%s235 + $0x10] sm:$0xff]
          %v1983 = vld [vmem:[%s235 + $0x18] sm:$0xff]
          %v1984 = vld [vmem:[%s235 + $0x20] sm:$0xff]
          %v1985 = vld [vmem:[%s235 + $0x28] sm:$0xff]
          %v1986 = vld [vmem:[%s235 + $0x30] sm:$0xff]
          %v1987 = vld [vmem:[%s235 + $0x38] sm:$0xff]
          %v1988 = vadd.f32 %v1980, %v1972
          %v1989 = vadd.f32 %v1981, %v1973
          %v1990 = vadd.f32 %v1982, %v1974
          %v1991 = vadd.f32 %v1983, %v1975
          %v1992 = vadd.f32 %v1984, %v1976
          %v1993 = vadd.f32 %v1985, %v1977
          %v1994 = vadd.f32 %v1986, %v1978
          %v1995 = vadd.f32 %v1987, %v1979
          %vm1996 = vcmask 130048
          %1997 = vst.msk [vmem:[%s235] sm:$0xff] %vm1996, %v1988
          %1998 = vst.msk [vmem:[%s235 + $0x8] sm:$0xff] %vm1996, %v1989
          %1999 = vst.msk [vmem:[%s235 + $0x10] sm:$0xff] %vm1996, %v1990
          %2000 = vst.msk [vmem:[%s235 + $0x18] sm:$0xff] %vm1996, %v1991
          %2001 = vst.msk [vmem:[%s235 + $0x20] sm:$0xff] %vm1996, %v1992
          %2002 = vst.msk [vmem:[%s235 + $0x28] sm:$0xff] %vm1996, %v1993
          %2003 = vst.msk [vmem:[%s235 + $0x30] sm:$0xff] %vm1996, %v1994
          %2004 = vst.msk [vmem:[%s235 + $0x38] sm:$0xff] %vm1996, %v1995
        $region44: #{dfusion_forward.1} parent=31 // pred_fallthru
          _
        %p2005 = scmp.eq.s32.totalorder %s39, 1
        // Predicated region
        $region45: #{dfusion_forward.1} parent=31 // pred_check
          %p2006 = pneg %p2005
        $region46: #{dfusion_forward.1} parent=31 // pred_check_branch
          %2008 = sbr.rel (%p2006) target = $region48
        $region47: #{dfusion_forward.1} parent=31 // pred_region
          %v2009 = vld [vmem:[%s235] sm:$0xff]
          %v2010 = vld [vmem:[%s235 + $0x8] sm:$0xff]
          %v2011 = vld [vmem:[%s235 + $0x10] sm:$0xff]
          %v2012 = vld [vmem:[%s235 + $0x18] sm:$0xff]
          %v2013 = vld [vmem:[%s235 + $0x20] sm:$0xff]
          %v2014 = vld [vmem:[%s235 + $0x28] sm:$0xff]
          %v2015 = vld [vmem:[%s235 + $0x30] sm:$0xff]
          %v2016 = vld [vmem:[%s235 + $0x38] sm:$0xff]
          %s2017 = sld [smem:[#allocation5]]
          %v2018 = vstv %s2017
          %v2019 = vadd.f32 %v2009, %v2018
          %v2020 = vadd.f32 %v2010, %v2018
          %v2021 = vadd.f32 %v2011, %v2018
          %v2022 = vadd.f32 %v2012, %v2018
          %v2023 = vadd.f32 %v2013, %v2018
          %v2024 = vadd.f32 %v2014, %v2018
          %v2025 = vadd.f32 %v2015, %v2018
          %v2026 = vadd.f32 %v2016, %v2018
          %v2027 = vmax.f32 %v2019, 0.0
          %v2028 = vmax.f32 %v2020, 0.0
          %v2029 = vmax.f32 %v2021, 0.0
          %v2030 = vmax.f32 %v2022, 0.0
          %v2031 = vmax.f32 %v2023, 0.0
          %v2032 = vmax.f32 %v2024, 0.0
          %v2033 = vmax.f32 %v2025, 0.0
          %v2034 = vmax.f32 %v2026, 0.0
          %vm2035 = vcmask 130048
          %2036 = vst.msk [vmem:[%s235] sm:$0xff] %vm2035, %v2027
          %2037 = vst.msk [vmem:[%s235 + $0x8] sm:$0xff] %vm2035, %v2028
          %2038 = vst.msk [vmem:[%s235 + $0x10] sm:$0xff] %vm2035, %v2029
          %2039 = vst.msk [vmem:[%s235 + $0x18] sm:$0xff] %vm2035, %v2030
          %2040 = vst.msk [vmem:[%s235 + $0x20] sm:$0xff] %vm2035, %v2031
          %2041 = vst.msk [vmem:[%s235 + $0x28] sm:$0xff] %vm2035, %v2032
          %2042 = vst.msk [vmem:[%s235 + $0x30] sm:$0xff] %vm2035, %v2033
          %2043 = vst.msk [vmem:[%s235 + $0x38] sm:$0xff] %vm2035, %v2034
        $region48: #{dfusion_forward.1} parent=31 // pred_fallthru
          _
        %s2044 = sand.u32 %s134, 1
        %s2045 = scalar_lea.sflag [#allocation7], %s2044
        %s2046 = sand.u32 %s134, 1
        %s2047 = smul.addr %s2046, 64
        %s2048 = scalar_lea.vmem [#allocation9], %s2047
        // Predicated region
        $region49: #{dfusion_forward.1} parent=31 // pred_check
          %p2049 = pneg %p144
        $region50: #{dfusion_forward.1} parent=31 // pred_check_branch
          %2051 = sbr.rel (%p2049) target = $region52
        $region51: #{dfusion_forward.1} parent=31 // pred_region
          %2053 = vsyncadd %s2045, 0
          %s2054 = smul.addr %s38, 8
          %s2055 = smul.addr %s2054, 8
          %s2056 = scalar_lea.hbm %s5, %s2055
          %s2057 = sshll.u32 %s2048, 4
          %s2058 = int_to_ptr.vmem [resolvable:$true] %s2057
          %s2059 = sshll.u32 %s2056, 4
          %s2060 = int_to_ptr.hbm [resolvable:$true] %s2059
          %2065 = dma.vmem_to_hbm [thread:$0]  %s2058, 1024, %s2060, %s2045, 128, 128, 8
        $region52: #{dfusion_forward.1} parent=31 // pred_fallthru
          _
      $region32: #{dfusion_forward.1} parent=5 // pred_fallthru
        _
      %p2066 = scmp.le.s32.totalorder 2, %s29
      // Predicated region
      $region53: #{dfusion_forward.1} parent=5 // pred_check
        %p2067 = pneg %p2066
      $region54: #{dfusion_forward.1} parent=5 // pred_check_branch
        %2069 = sbr.rel (%p2067) target = $region56
      $region55: #{dfusion_forward.1} parent=5 // pred_region
        %s2070 = ssub.s32 %s29, 2
        // Predicated region
        $region57: #{dfusion_forward.1} parent=55 // pred_check
          %p2071 = pneg %p150
        $region58: #{dfusion_forward.1} parent=55 // pred_check_branch
          %2073 = sbr.rel (%p2071) target = $region60
        $region59: #{dfusion_forward.1} parent=55 // pred_region
          %s2074 = sand.u32 %s135, 1
          %s2075 = scalar_lea.sflag [#allocation7], %s2074
          %s2076 = sand.u32 %s135, 1
          %s2077 = smul.addr %s2076, 64
          %s2078 = scalar_lea.vmem [#allocation9], %s2077
          %2080 = dma.done %s2075, 1024
        $region60: #{dfusion_forward.1} parent=55 // pred_fallthru
          _
      $region56: #{dfusion_forward.1} parent=5 // pred_fallthru
        _
    $region6: #{dfusion_forward.1} parent=1 // loop_footer
      %s33 = sadd.s32 1, %s29
    $region7: #{dfusion_forward.1} parent=1 // loop_footer_branch
      %28 = sbr.rel target = $region3
    $region8: #{dfusion_forward.1} parent=1 // loop_exit
      _
    %2081 = vsyncpa [#allocation7], 1
    %s2082 = scalar_lea.sflag [#allocation7], 1
    %2083 = vsyncpa %s2082, 1
    %2084 = vsyncpa [#allocation8], 1
    %s2085 = scalar_lea.sflag [#allocation8], 1
    %2086 = vsyncpa %s2085, 1

</llo_original>
